<compile_context>
chip_gen: v6e
topology: v6e:2x2x1
jax: 0.10.0
libtpu: 0.0.40
codegen_flags: <defaults>
</compile_context>

<pallas_src>
import jax
import jax.numpy as jnp
from jax.experimental import pallas as pl
from jax.experimental.pallas import tpu as pltpu


# ----------------------------------------------------------------------------
# Tiling helpers
# ----------------------------------------------------------------------------
def _round_up(x, m):
    return (x + m - 1) // m * m


def _pick_tm(M, tmax=1024):
    """Lane-dim tile: multiple of 128, <= tmax, prefer >=2 grid steps (v7x 2 TCs)."""
    tm = min(tmax, _round_up(M, 128))
    if M > 128:
        tm = min(tm, _round_up(-(-M // 2), 128))
    return max(tm, 128)


# ----------------------------------------------------------------------------
# Fused generator heads:  y^T = W^T @ X^T + b ; tanh on first 3 rows (image head)
#   x^T : (K, tm) bf16, w^T : (24, K) bf16, b : (24, 1) f32  ->  out (24, tm) f32
# ----------------------------------------------------------------------------
def _gen_fused_kernel(xt_ref, wt_ref, b_ref, o_ref):
    y = jnp.dot(wt_ref[...], xt_ref[...], preferred_element_type=jnp.float32)
    y = y + b_ref[...]
    row = jax.lax.broadcasted_iota(jnp.int32, y.shape, 0)
    o_ref[...] = jnp.where(row < 3, jnp.tanh(y), y)


def pallas_gen_heads(xt, wt, b, tm):
    K, M_pad = xt.shape
    N = wt.shape[0]
    return pl.pallas_call(
        _gen_fused_kernel,
        out_shape=jax.ShapeDtypeStruct((N, M_pad), jnp.float32),
        grid=(M_pad // tm,),
        in_specs=[
            pl.BlockSpec((K, tm), lambda i: (0, i)),
            pl.BlockSpec((N, K), lambda i: (0, 0)),
            pl.BlockSpec((N, 1), lambda i: (0, 0)),
        ],
        out_specs=pl.BlockSpec((N, tm), lambda i: (0, i)),
        compiler_params=pltpu.CompilerParams(dimension_semantics=("parallel",)),
    )(xt, wt, b)


# ----------------------------------------------------------------------------
# Fused 2-layer PatchGAN discriminator (real + fake batched together):
#   h^T = leaky_relu(W1^T @ X^T + b1, 0.2) ; out^T = sigmoid(W2^T @ h^T + b2)
#   x^T : (K, tm) bf16, w1^T : (64, K) bf16, w2^T : (8, 64) bf16 (row 0 real, rest 0)
# ----------------------------------------------------------------------------
def _disc_fused_kernel(xt_ref, w1t_ref, b1_ref, w2t_ref, b2_ref, o_ref):
    h = jnp.dot(w1t_ref[...], xt_ref[...], preferred_element_type=jnp.float32)
    h = h + b1_ref[...]
    h = jnp.where(h > 0, h, 0.2 * h)                  # LeakyReLU(0.2)
    y = jnp.dot(w2t_ref[...], h.astype(jnp.bfloat16),
                preferred_element_type=jnp.float32)
    y = y + b2_ref[...]
    o_ref[...] = jax.nn.sigmoid(y)                    # use_sigmoid=True


def pallas_discriminator_core(xt, w1t, b1, w2t, b2, tm):
    K, M_pad = xt.shape
    N1 = w1t.shape[0]
    N2 = w2t.shape[0]                                 # 8 (padded from 1, lane-dense)
    return pl.pallas_call(
        _disc_fused_kernel,
        out_shape=jax.ShapeDtypeStruct((N2, M_pad), jnp.float32),
        grid=(M_pad // tm,),
        in_specs=[
            pl.BlockSpec((K, tm), lambda i: (0, i)),
            pl.BlockSpec((N1, K), lambda i: (0, 0)),
            pl.BlockSpec((N1, 1), lambda i: (0, 0)),
            pl.BlockSpec((N2, N1), lambda i: (0, 0)),
            pl.BlockSpec((N2, 1), lambda i: (0, 0)),
        ],
        out_specs=pl.BlockSpec((N2, tm), lambda i: (0, i)),
        compiler_params=pltpu.CompilerParams(dimension_semantics=("parallel",)),
    )(xt, w1t, b1, w2t, b2)


# ----------------------------------------------------------------------------
# create_disc_label_map kernel:
#   diff = mean_c |real - fake| ; 31x31/stride-4/pad-15 avg-pool (as two matmuls,
#   count_include_pad=False) ; label = (avg <= 0.06)   [done as s <= thresh*cnt]
# Pooling masks / count matrix are loop-invariant -> precomputed outside the grid.
# ----------------------------------------------------------------------------
def _label_map_kernel(real_ref, fake_ref, aht_ref, aw_ref, tc_ref, out_ref):
    diff = jnp.mean(jnp.abs(real_ref[0] - fake_ref[0]), axis=0)          # (H, W)
    s = jnp.dot(diff, aw_ref[...], preferred_element_type=jnp.float32)   # (H, Wo)
    s = jnp.dot(aht_ref[...], s, preferred_element_type=jnp.float32)     # (Ho, Wo)
    out_ref[0, 0] = (s <= tc_ref[...]).astype(jnp.float32)


def create_disc_label_map(real_nchw, fake_nchw):
    B, C, H, W = real_nchw.shape
    assert C == 3
    ksize, stride, pad, thresh = 31, 4, 15, 0.06
    half = (ksize - 1) // 2
    Ho = (H + 2 * pad - ksize) // stride + 1
    Wo = (W + 2 * pad - ksize) // stride + 1

    # Loop-invariant pooling matrices (built once in plain JAX, not per batch step).
    hh, ii = jnp.arange(H), jnp.arange(Ho)
    a_ht = (jnp.abs(hh[None, :] - stride * ii[:, None]) <= half).astype(jnp.float32)
    ww, jj = jnp.arange(W), jnp.arange(Wo)
    a_w = (jnp.abs(ww[:, None] - stride * jj[None, :]) <= half).astype(jnp.float32)
    cnt = a_ht.sum(axis=1, keepdims=True) * a_w.sum(axis=0, keepdims=True)  # (Ho, Wo)
    tcnt = thresh * cnt

    return pl.pallas_call(
        _label_map_kernel,
        out_shape=jax.ShapeDtypeStruct((B, 1, Ho, Wo), jnp.float32),
        grid=(B,),
        in_specs=[
            pl.BlockSpec((1, 3, H, W), lambda b: (b, 0, 0, 0)),
            pl.BlockSpec((1, 3, H, W), lambda b: (b, 0, 0, 0)),
            pl.BlockSpec((Ho, H), lambda b: (0, 0)),
            pl.BlockSpec((W, Wo), lambda b: (0, 0)),
            pl.BlockSpec((Ho, Wo), lambda b: (0, 0)),
        ],
        out_specs=pl.BlockSpec((1, 1, Ho, Wo), lambda b: (b, 0, 0, 0)),
        compiler_params=pltpu.CompilerParams(dimension_semantics=("parallel",)),
    )(real_nchw.astype(jnp.float32), fake_nchw.astype(jnp.float32), a_ht, a_w, tcnt)


# ----------------------------------------------------------------------------
# Plain-JAX glue: im2col producing a TRANSPOSED (K, M_pad) bf16 patch matrix
# ----------------------------------------------------------------------------
def im2col_t(x_nhwc, kh, kw, stride, pad, tm):
    x = jnp.pad(x_nhwc, ((0, 0), (pad, pad), (pad, pad), (0, 0)))
    B, Hp, Wp, C = x.shape
    Ho = (Hp - kh) // stride + 1
    Wo = (Wp - kw) // stride + 1
    cols = []
    for i in range(kh):
        for j in range(kw):
            cols.append(x[:, i:i + stride * Ho:stride, j:j + stride * Wo:stride, :])
    patches = jnp.concatenate(cols, axis=-1)                 # (B, Ho, Wo, kh*kw*C)
    M, K = B * Ho * Wo, kh * kw * C
    xt = patches.reshape(M, K).T                             # (K, M) lane-dense
    M_pad = _round_up(M, tm)
    if M_pad != M:
        xt = jnp.pad(xt, ((0, 0), (0, M_pad - M)))
    return xt.astype(jnp.bfloat16), M, Ho, Wo


# ----------------------------------------------------------------------------
# Parameter construction (deterministic, in-script)
# ----------------------------------------------------------------------------
def init_params(key, in_ch=6, ndf=64):
    ks = jax.random.split(key, 4)
    scale = 0.05
    return {
        # generator stand-in: 3x3 conv heads (image: tanh, seg: 20-ch logits)
        "g_w_img": scale * jax.random.normal(ks[0], (in_ch * 9, 3), jnp.float32),
        "g_b_img": jnp.zeros((3,), jnp.float32),
        "g_w_seg": scale * jax.random.normal(ks[1], (in_ch * 9, 20), jnp.float32),
        "g_b_seg": jnp.zeros((20,), jnp.float32),
        # discriminator stand-in: 4x4/s2 conv (3 -> ndf) + 1x1 conv (ndf -> 1), sigmoid
        "d_w1": scale * jax.random.normal(ks[2], (3 * 16, ndf), jnp.float32),
        "d_b1": jnp.zeros((ndf,), jnp.float32),
        "d_w2": scale * jax.random.normal(ks[3], (ndf, 1), jnp.float32),
        "d_b2": jnp.zeros((1,), jnp.float32),
    }


# ----------------------------------------------------------------------------
# Forward pass (GAN.forward, training branch, netD == 'multi_scale_img')
# ----------------------------------------------------------------------------
@jax.jit
def gan_forward(params, inp_nchw, gt_nchw):
    inp = jnp.transpose(inp_nchw, (0, 2, 3, 1)).astype(jnp.float32)   # NHWC
    B, H, W, _ = inp.shape

    # --- netG (MyFRRN stand-in): fused image(tanh) + seg(logits) heads -------
    M_g = B * H * W
    tm_g = _pick_tm(M_g)
    g_xt, Mg, _, _ = im2col_t(inp, 3, 3, 1, 1, tm_g)
    gw = jnp.concatenate([params["g_w_img"], params["g_w_seg"]], axis=1)  # (54, 23)
    gw = jnp.pad(gw, ((0, 0), (0, 1)))                                    # pad N -> 24
    gwt = gw.T.astype(jnp.bfloat16)                                       # (24, 54)
    gb = jnp.concatenate(
        [params["g_b_img"], params["g_b_seg"], jnp.zeros((1,), jnp.float32)]
    ).reshape(24, 1)
    g_out = pallas_gen_heads(g_xt, gwt, gb, tm_g)[:, :Mg]                 # (24, M)
    fake_image = g_out[:3].reshape(3, B, H, W).transpose(1, 0, 2, 3)      # (B,3,H,W)
    fake_seg = g_out[3:23].reshape(20, B, H, W).transpose(1, 0, 2, 3)     # (B,20,H,W)
    fake_nhwc = jnp.transpose(fake_image, (0, 2, 3, 1))

    # --- netD ('multi_scale_img'): fake + real batched into one pass ---------
    # .detach() only affects gradients, so pred_fake_D and pred_fake_G share one
    # forward computation; real/fake share one im2col + one pallas_call.
    real_nhwc = jnp.transpose(gt_nchw[:, :3], (0, 2, 3, 1)).astype(jnp.float32)
    d_in = jnp.concatenate([fake_nhwc, real_nhwc], axis=0)               # (2B, H, W, 3)
    M_d = 2 * B * (H // 2) * (W // 2)
    tm_d = _pick_tm(M_d)
    d_xt, Md, Ho, Wo = im2col_t(d_in, 4, 4, 2, 1, tm_d)
    w1t = params["d_w1"].T.astype(jnp.bfloat16)                          # (64, 48)
    b1 = params["d_b1"].reshape(-1, 1)
    ndf = w1t.shape[0]
    w2t = jnp.zeros((8, ndf), jnp.float32).at[0].set(
        params["d_w2"][:, 0]).astype(jnp.bfloat16)                       # (8, 64)
    b2 = jnp.zeros((8, 1), jnp.float32).at[0, 0].set(params["d_b2"][0])
    d_out = pallas_discriminator_core(d_xt, w1t, b1, w2t, b2, tm_d)      # (8, M_pad)
    preds = d_out[0, :Md].reshape(2 * B, 1, Ho, Wo)                      # NCHW
    pred_fake_D = preds[:B]          # netD(fake_image.detach())
    pred_real_D = preds[B:]          # netD(gt[:, :3])
    pred_fake_G = pred_fake_D        # netD(fake_image): same forward values

    # --- create_disc_label_map -----------------------------------------------
    label_map = create_disc_label_map(gt_nchw[:, :3], fake_image)

    return fake_image, fake_seg, pred_fake_D, pred_real_D, pred_fake_G, label_map


if __name__ == "__main__":
    key = jax.random.PRNGKey(0)
    k_in, k_gt, k_par = jax.random.split(key, 3)

    B, H, W = 2, 32, 32
    x = jax.random.uniform(k_in, (B, 6, H, W), jnp.float32, -1.0, 1.0)   # input frames
    gt = jax.random.uniform(k_gt, (B, 3, H, W), jnp.float32, -1.0, 1.0)  # ground-truth RGB
    params = init_params(k_par, in_ch=6, ndf=64)

    outs = gan_forward(params, x, gt)
    outs = jax.block_until_ready(outs)

    fake_image, fake_seg, pf_d, pr_d, pf_g, label_map = outs
    assert fake_image.shape == (B, 3, H, W)
    assert fake_seg.shape == (B, 20, H, W)
    assert pf_d.shape == (B, 1, H // 2, W // 2)
    assert pr_d.shape == (B, 1, H // 2, W // 2)
    assert pf_g.shape == (B, 1, H // 2, W // 2)
    assert label_map.shape == (B, 1, (H - 1) // 4 + 1, (W - 1) // 4 + 1)
    print("KERNEL_OK")
</pallas_src>

<mosaic_0001>
module attributes {stable_mosaic.version = 11 : i64} {
  func.func @_gen_fused_kernel(%arg0: i32, %arg1: memref<54x1024xbf16, #tpu.memory_space<vmem>>, %arg2: memref<24x54xbf16, #tpu.memory_space<vmem>>, %arg3: memref<24x1xf32, #tpu.memory_space<vmem>>, %arg4: memref<24x1024xf32, #tpu.memory_space<vmem>>) attributes {dimension_semantics = [#tpu.dimension_semantics<parallel>], iteration_bounds = array<i64: 2>, scalar_prefetch = 0 : i64, scratch_operands = 0 : i64, tpu.core_type = #tpu.core_type<tc>, window_params = [{transform_indices = @transform_0, window_bounds = array<i64: 54, 1024>}, {pipeline_mode = #tpu.pipeline_mode<synchronous>, transform_indices = @transform_1, window_bounds = array<i64: 24, 54>}, {pipeline_mode = #tpu.pipeline_mode<synchronous>, transform_indices = @transform_2, window_bounds = array<i64: 24, 1>}, {transform_indices = @transform_3, window_bounds = array<i64: 24, 1024>}]} {
    %c0 = arith.constant 0 : index
    %c0_0 = arith.constant 0 : index
    %0 = vector.load %arg2[%c0, %c0_0] : memref<24x54xbf16, #tpu.memory_space<vmem>>, vector<24x54xbf16>
    %c0_1 = arith.constant 0 : index
    %c0_2 = arith.constant 0 : index
    %1 = vector.load %arg1[%c0_1, %c0_2] : memref<54x1024xbf16, #tpu.memory_space<vmem>>, vector<54x1024xbf16>
    %cst = arith.constant dense<0.000000e+00> : vector<24x1024xf32>
    %2 = tpu.matmul %0, %1, %cst {dimension_numbers = #tpu.dot_dimension_numbers<[1], [0], [0], [1], [0, 0, 1, 1], [], []>} : vector<24x54xbf16>, vector<54x1024xbf16>, vector<24x1024xf32> -> vector<24x1024xf32>
    %c0_3 = arith.constant 0 : index
    %c0_4 = arith.constant 0 : index
    %3 = vector.load %arg3[%c0_3, %c0_4] : memref<24x1xf32, #tpu.memory_space<vmem>>, vector<24x1xf32>
    %4 = vector.broadcast %3 : vector<24x1xf32> to vector<24x1024xf32>
    %5 = arith.addf %2, %4 : vector<24x1024xf32>
    %6 = tpu.iota {dimensions = array<i32: 0>} : vector<24x1024xi32>
    %c3_i32 = arith.constant 3 : i32
    %7 = vector.broadcast %c3_i32 : i32 to vector<24x1024xi32>
    %8 = arith.cmpi slt, %6, %7 : vector<24x1024xi32>
    %9 = math.tanh %5 : vector<24x1024xf32>
    %10 = arith.select %8, %9, %5 : vector<24x1024xi1>, vector<24x1024xf32>
    %c0_5 = arith.constant 0 : index
    %c0_6 = arith.constant 0 : index
    %11 = vector.load %arg4[%c0_5, %c0_6] : memref<24x1024xf32, #tpu.memory_space<vmem>>, vector<24x1024xf32>
    tpu.vector_store %arg4[%c0_5, %c0_6], %10 {strides = array<i32>} : memref<24x1024xf32, #tpu.memory_space<vmem>>, vector<24x1024xf32>,
    return
  }
  func.func @transform_0(%arg0: i32) -> (i32, i32) {
    %c0_i32 = arith.constant 0 : i32
    %c0_i32_0 = arith.constant 0 : i32
    return %c0_i32, %arg0 : i32, i32
  }
  func.func @transform_1(%arg0: i32) -> (i32, i32) {
    %c0_i32 = arith.constant 0 : i32
    %c0_i32_0 = arith.constant 0 : i32
    %c0_i32_1 = arith.constant 0 : i32
    return %c0_i32, %c0_i32_0 : i32, i32
  }
  func.func @transform_2(%arg0: i32) -> (i32, i32) {
    %c0_i32 = arith.constant 0 : i32
    %c0_i32_0 = arith.constant 0 : i32
    %c0_i32_1 = arith.constant 0 : i32
    return %c0_i32, %c0_i32_0 : i32, i32
  }
  func.func @transform_3(%arg0: i32) -> (i32, i32) {
    %c0_i32 = arith.constant 0 : i32
    %c0_i32_0 = arith.constant 0 : i32
    return %c0_i32, %arg0 : i32, i32
  }
}

module attributes {stable_mosaic.version = 11 : i64} {
  func.func @_disc_fused_kernel(%arg0: i32, %arg1: memref<48x512xbf16, #tpu.memory_space<vmem>>, %arg2: memref<64x48xbf16, #tpu.memory_space<vmem>>, %arg3: memref<64x1xf32, #tpu.memory_space<vmem>>, %arg4: memref<8x64xbf16, #tpu.memory_space<vmem>>, %arg5: memref<8x1xf32, #tpu.memory_space<vmem>>, %arg6: memref<8x512xf32, #tpu.memory_space<vmem>>) attributes {dimension_semantics = [#tpu.dimension_semantics<parallel>], iteration_bounds = array<i64: 2>, scalar_prefetch = 0 : i64, scratch_operands = 0 : i64, tpu.core_type = #tpu.core_type<tc>, window_params = [{transform_indices = @transform_0, window_bounds = array<i64: 48, 512>}, {pipeline_mode = #tpu.pipeline_mode<synchronous>, transform_indices = @transform_1, window_bounds = array<i64: 64, 48>}, {pipeline_mode = #tpu.pipeline_mode<synchronous>, transform_indices = @transform_2, window_bounds = array<i64: 64, 1>}, {pipeline_mode = #tpu.pipeline_mode<synchronous>, transform_indices = @transform_3, window_bounds = array<i64: 8, 64>}, {pipeline_mode = #tpu.pipeline_mode<synchronous>, transform_indices = @transform_4, window_bounds = array<i64: 8, 1>}, {transform_indices = @transform_5, window_bounds = array<i64: 8, 512>}]} {
    %c0 = arith.constant 0 : index
    %c0_0 = arith.constant 0 : index
    %0 = vector.load %arg2[%c0, %c0_0] : memref<64x48xbf16, #tpu.memory_space<vmem>>, vector<64x48xbf16>
    %c0_1 = arith.constant 0 : index
    %c0_2 = arith.constant 0 : index
    %1 = vector.load %arg1[%c0_1, %c0_2] : memref<48x512xbf16, #tpu.memory_space<vmem>>, vector<48x512xbf16>
    %cst = arith.constant dense<0.000000e+00> : vector<64x512xf32>
    %2 = tpu.matmul %0, %1, %cst {dimension_numbers = #tpu.dot_dimension_numbers<[1], [0], [0], [1], [0, 0, 1, 1], [], []>} : vector<64x48xbf16>, vector<48x512xbf16>, vector<64x512xf32> -> vector<64x512xf32>
    %c0_3 = arith.constant 0 : index
    %c0_4 = arith.constant 0 : index
    %3 = vector.load %arg3[%c0_3, %c0_4] : memref<64x1xf32, #tpu.memory_space<vmem>>, vector<64x1xf32>
    %4 = vector.broadcast %3 : vector<64x1xf32> to vector<64x512xf32>
    %5 = arith.addf %2, %4 : vector<64x512xf32>
    %cst_5 = arith.constant 0.000000e+00 : f32
    %6 = vector.broadcast %cst_5 : f32 to vector<64x512xf32>
    %7 = arith.cmpf ogt, %5, %6 : vector<64x512xf32>
    %cst_6 = arith.constant 2.000000e-01 : f32
    %8 = vector.broadcast %cst_6 : f32 to vector<64x512xf32>
    %9 = arith.mulf %8, %5 : vector<64x512xf32>
    %10 = arith.select %7, %5, %9 : vector<64x512xi1>, vector<64x512xf32>
    %c0_7 = arith.constant 0 : index
    %c0_8 = arith.constant 0 : index
    %11 = vector.load %arg4[%c0_7, %c0_8] : memref<8x64xbf16, #tpu.memory_space<vmem>>, vector<8x64xbf16>
    %12 = arith.truncf %10 : vector<64x512xf32> to vector<64x512xbf16>
    %cst_9 = arith.constant dense<0.000000e+00> : vector<8x512xf32>
    %13 = tpu.matmul %11, %12, %cst_9 {dimension_numbers = #tpu.dot_dimension_numbers<[1], [0], [0], [1], [0, 0, 1, 1], [], []>} : vector<8x64xbf16>, vector<64x512xbf16>, vector<8x512xf32> -> vector<8x512xf32>
    %c0_10 = arith.constant 0 : index
    %c0_11 = arith.constant 0 : index
    %14 = vector.load %arg5[%c0_10, %c0_11] : memref<8x1xf32, #tpu.memory_space<vmem>>, vector<8x1xf32>
    %15 = vector.broadcast %14 : vector<8x1xf32> to vector<8x512xf32>
    %16 = arith.addf %13, %15 : vector<8x512xf32>
    %17 = arith.negf %16 : vector<8x512xf32>
    %18 = math.exp %17 : vector<8x512xf32>
    %cst_12 = arith.constant 1.000000e+00 : f32
    %19 = vector.broadcast %cst_12 : f32 to vector<8x512xf32>
    %20 = arith.addf %19, %18 : vector<8x512xf32>
    %21 = arith.divf %19, %20 : vector<8x512xf32>
    %c0_13 = arith.constant 0 : index
    %c0_14 = arith.constant 0 : index
    %22 = vector.load %arg6[%c0_13, %c0_14] : memref<8x512xf32, #tpu.memory_space<vmem>>, vector<8x512xf32>
    tpu.vector_store %arg6[%c0_13, %c0_14], %21 {strides = array<i32>} : memref<8x512xf32, #tpu.memory_space<vmem>>, vector<8x512xf32>,
    return
  }
  func.func @transform_0(%arg0: i32) -> (i32, i32) {
    %c0_i32 = arith.constant 0 : i32
    %c0_i32_0 = arith.constant 0 : i32
    return %c0_i32, %arg0 : i32, i32
  }
  func.func @transform_1(%arg0: i32) -> (i32, i32) {
    %c0_i32 = arith.constant 0 : i32
    %c0_i32_0 = arith.constant 0 : i32
    %c0_i32_1 = arith.constant 0 : i32
    return %c0_i32, %c0_i32_0 : i32, i32
  }
  func.func @transform_2(%arg0: i32) -> (i32, i32) {
    %c0_i32 = arith.constant 0 : i32
    %c0_i32_0 = arith.constant 0 : i32
    %c0_i32_1 = arith.constant 0 : i32
    return %c0_i32, %c0_i32_0 : i32, i32
  }
  func.func @transform_3(%arg0: i32) -> (i32, i32) {
    %c0_i32 = arith.constant 0 : i32
    %c0_i32_0 = arith.constant 0 : i32
    %c0_i32_1 = arith.constant 0 : i32
    return %c0_i32, %c0_i32_0 : i32, i32
  }
  func.func @transform_4(%arg0: i32) -> (i32, i32) {
    %c0_i32 = arith.constant 0 : i32
    %c0_i32_0 = arith.constant 0 : i32
    %c0_i32_1 = arith.constant 0 : i32
    return %c0_i32, %c0_i32_0 : i32, i32
  }
  func.func @transform_5(%arg0: i32) -> (i32, i32) {
    %c0_i32 = arith.constant 0 : i32
    %c0_i32_0 = arith.constant 0 : i32
    return %c0_i32, %arg0 : i32, i32
  }
}

module attributes {stable_mosaic.version = 11 : i64} {
  func.func @_label_map_kernel(%arg0: i32, %arg1: memref<1x3x32x32xf32, #tpu.memory_space<vmem>>, %arg2: memref<1x3x32x32xf32, #tpu.memory_space<vmem>>, %arg3: memref<8x32xf32, #tpu.memory_space<vmem>>, %arg4: memref<32x8xf32, #tpu.memory_space<vmem>>, %arg5: memref<8x8xf32, #tpu.memory_space<vmem>>, %arg6: memref<1x1x8x8xf32, #tpu.memory_space<vmem>>) attributes {dimension_semantics = [#tpu.dimension_semantics<parallel>], iteration_bounds = array<i64: 2>, scalar_prefetch = 0 : i64, scratch_operands = 0 : i64, tpu.core_type = #tpu.core_type<tc>, window_params = [{transform_indices = @transform_0, window_bounds = array<i64: 1, 3, 32, 32>}, {transform_indices = @transform_1, window_bounds = array<i64: 1, 3, 32, 32>}, {pipeline_mode = #tpu.pipeline_mode<synchronous>, transform_indices = @transform_2, window_bounds = array<i64: 8, 32>}, {pipeline_mode = #tpu.pipeline_mode<synchronous>, transform_indices = @transform_3, window_bounds = array<i64: 32, 8>}, {pipeline_mode = #tpu.pipeline_mode<synchronous>, transform_indices = @transform_4, window_bounds = array<i64: 8, 8>}, {transform_indices = @transform_5, window_bounds = array<i64: 1, 1, 8, 8>}]} {
    %c0 = arith.constant 0 : index
    %c0_0 = arith.constant 0 : index
    %c0_1 = arith.constant 0 : index
    %c0_2 = arith.constant 0 : index
    %0 = vector.load %arg1[%c0, %c0_0, %c0_1, %c0_2] : memref<1x3x32x32xf32, #tpu.memory_space<vmem>>, vector<1x3x32x32xf32>
    %1 = vector.shape_cast %0 : vector<1x3x32x32xf32> to vector<3x32x32xf32>
    %c0_3 = arith.constant 0 : index
    %c0_4 = arith.constant 0 : index
    %c0_5 = arith.constant 0 : index
    %c0_6 = arith.constant 0 : index
    %2 = vector.load %arg2[%c0_3, %c0_4, %c0_5, %c0_6] : memref<1x3x32x32xf32, #tpu.memory_space<vmem>>, vector<1x3x32x32xf32>
    %3 = vector.shape_cast %2 : vector<1x3x32x32xf32> to vector<3x32x32xf32>
    %4 = arith.subf %1, %3 : vector<3x32x32xf32>
    %5 = math.absf %4 : vector<3x32x32xf32>
    %cst = arith.constant dense<0.000000e+00> : vector<32x32xf32>
    %6 = vector.multi_reduction <add>, %5, %cst [0] : vector<3x32x32xf32> to vector<32x32xf32>
    %cst_7 = arith.constant 3.000000e+00 : f32
    %7 = vector.broadcast %cst_7 : f32 to vector<32x32xf32>
    %8 = arith.divf %6, %7 : vector<32x32xf32>
    %c0_8 = arith.constant 0 : index
    %c0_9 = arith.constant 0 : index
    %9 = vector.load %arg4[%c0_8, %c0_9] : memref<32x8xf32, #tpu.memory_space<vmem>>, vector<32x8xf32>
    %cst_10 = arith.constant dense<0.000000e+00> : vector<32x8xf32>
    %10 = tpu.matmul %8, %9, %cst_10 {dimension_numbers = #tpu.dot_dimension_numbers<[1], [0], [0], [1], [0, 0, 1, 1], [], []>} : vector<32x32xf32>, vector<32x8xf32>, vector<32x8xf32> -> vector<32x8xf32>
    %c0_11 = arith.constant 0 : index
    %c0_12 = arith.constant 0 : index
    %11 = vector.load %arg3[%c0_11, %c0_12] : memref<8x32xf32, #tpu.memory_space<vmem>>, vector<8x32xf32>
    %cst_13 = arith.constant dense<0.000000e+00> : vector<8x8xf32>
    %12 = tpu.matmul %11, %10, %cst_13 {dimension_numbers = #tpu.dot_dimension_numbers<[1], [0], [0], [1], [0, 0, 1, 1], [], []>} : vector<8x32xf32>, vector<32x8xf32>, vector<8x8xf32> -> vector<8x8xf32>
    %c0_14 = arith.constant 0 : index
    %c0_15 = arith.constant 0 : index
    %13 = vector.load %arg5[%c0_14, %c0_15] : memref<8x8xf32, #tpu.memory_space<vmem>>, vector<8x8xf32>
    %14 = arith.cmpf ole, %12, %13 : vector<8x8xf32>
    %15 = arith.extui %14 : vector<8x8xi1> to vector<8x8xi32>
    %16 = arith.sitofp %15 : vector<8x8xi32> to vector<8x8xf32>
    %c0_16 = arith.constant 0 : index
    %c0_17 = arith.constant 0 : index
    %c0_18 = arith.constant 0 : index
    %c0_19 = arith.constant 0 : index
    %17 = vector.load %arg6[%c0_16, %c0_17, %c0_18, %c0_19] : memref<1x1x8x8xf32, #tpu.memory_space<vmem>>, vector<1x1x8x8xf32>
    %18 = vector.shape_cast %17 : vector<1x1x8x8xf32> to vector<8x8xf32>
    %19 = vector.shape_cast %16 : vector<8x8xf32> to vector<1x1x8x8xf32>
    tpu.vector_store %arg6[%c0_16, %c0_17, %c0_18, %c0_19], %19 {strides = array<i32>} : memref<1x1x8x8xf32, #tpu.memory_space<vmem>>, vector<1x1x8x8xf32>,
    return
  }
  func.func @transform_0(%arg0: i32) -> (i32, i32, i32, i32) {
    %c0_i32 = arith.constant 0 : i32
    %c0_i32_0 = arith.constant 0 : i32
    %c0_i32_1 = arith.constant 0 : i32
    %c0_i32_2 = arith.constant 0 : i32
    return %arg0, %c0_i32, %c0_i32_0, %c0_i32_1 : i32, i32, i32, i32
  }
  func.func @transform_1(%arg0: i32) -> (i32, i32, i32, i32) {
    %c0_i32 = arith.constant 0 : i32
    %c0_i32_0 = arith.constant 0 : i32
    %c0_i32_1 = arith.constant 0 : i32
    %c0_i32_2 = arith.constant 0 : i32
    return %arg0, %c0_i32, %c0_i32_0, %c0_i32_1 : i32, i32, i32, i32
  }
  func.func @transform_2(%arg0: i32) -> (i32, i32) {
    %c0_i32 = arith.constant 0 : i32
    %c0_i32_0 = arith.constant 0 : i32
    %c0_i32_1 = arith.constant 0 : i32
    return %c0_i32, %c0_i32_0 : i32, i32
  }
  func.func @transform_3(%arg0: i32) -> (i32, i32) {
    %c0_i32 = arith.constant 0 : i32
    %c0_i32_0 = arith.constant 0 : i32
    %c0_i32_1 = arith.constant 0 : i32
    return %c0_i32, %c0_i32_0 : i32, i32
  }
  func.func @transform_4(%arg0: i32) -> (i32, i32) {
    %c0_i32 = arith.constant 0 : i32
    %c0_i32_0 = arith.constant 0 : i32
    %c0_i32_1 = arith.constant 0 : i32
    return %c0_i32, %c0_i32_0 : i32, i32
  }
  func.func @transform_5(%arg0: i32) -> (i32, i32, i32, i32) {
    %c0_i32 = arith.constant 0 : i32
    %c0_i32_0 = arith.constant 0 : i32
    %c0_i32_1 = arith.constant 0 : i32
    %c0_i32_2 = arith.constant 0 : i32
    return %arg0, %c0_i32, %c0_i32_0, %c0_i32_1 : i32, i32, i32, i32
  }
}

</mosaic_0001>

<llo_original>
// kernel: gan_forward.3
$region0: #{gan_forward.3}
  #allocation0 [shape = 'u32[]', space=smem, size = 0x4, offset = 0x4, fixed_abs, tag = 'smem constant byte address 0x4 - core index']
  #allocation1 [shape = 'u32[144,128]{1,0:T(1,128)}', space=vmem, size = 0x12000, scoped, tag = 'internal scratch']
  %s0 = inlined_call_operand.vmem [shape: bf16[54,2048], index: 0, kind: input, shape index: {}]
  %s1 = inlined_call_operand.vmem [shape: bf16[24,54], index: 1, kind: input, shape index: {}]
  %s2 = inlined_call_operand.vmem [shape: f32[24,1], index: 2, kind: input, shape index: {}]
  %s3 = inlined_call_operand.vmem [shape: f32[24,2048], index: 3, kind: output, shape index: {}]
  %s4 = sld [smem:[#allocation0]]
  $region87: #{gan_forward.3} parent=0
    _
  %s6 = ssub.s32 1, %s4
  %s7 = scalar_select 0, %s6, %s4
  $region1: #{gan_forward.3} parent=0
    #allocation2 [shape = 'u8[229376]{0}', space=vmem, size = 0x38000, scoped, tag = 'input window, operand 0']
    #allocation3 [shape = 'u8[196608]{0}', space=vmem, size = 0x30000, scoped, tag = 'output window, operand 0']
    loop: start=0, step=1, limit=4
    $region2: #{gan_forward.3} parent=1 // loop_pre_header
      _
    $region3: #{gan_forward.3} parent=1 // loop_header
      %s9 = sphi 0, %s13
      %p10 = scmp.ge.s32.totalorder %s9, 4
      %s19 = sphi 0, %s21
      %s22 = sphi 0, %s19
      %s23 = sphi 0, %s22
      %s39 = sphi 0, %s23
      %s43 = sphi 0, %s43
      %s45 = sphi 0, %s43
      %s46 = sphi 0, %s45
      %s60 = sphi 0, %s46
      %s64 = sphi 0, %s64
      %s66 = sphi 0, %s64
      %s67 = sphi 0, %s66
      %s81 = sphi 0, %s67
      %s87 = sphi 0, %s89
      %s90 = sphi 0, %s87
      %s91 = sphi 0, %s90
      %s107 = sphi 0, %s91
    $region4: #{gan_forward.3} parent=1 // loop_header_branch
      %12 = sbr.rel (%p10) target = $region8
    $region5: #{gan_forward.3} parent=1 // loop_body
      %s14 = ssub.s32 %s9, 1
      %s15 = ssub.s32 %s9, 2
      %s16 = sadd.s32 %s9, 1
      %s17 = ssub.s32 %s9, %s16
      %p18 = scmp.eq.s32.totalorder %s17, 0
      %s20 = sadd.s32 %s19, 1
      %s21 = scalar_select %p18, %s19, %s20
      %p24 = pneg %p18
      %p25 = scmp.eq.s32.totalorder %s9, 1
      %p26 = por %p24, %p25
      %p27 = scmp.ne.s32.totalorder %s19, %s22
      %p28 = scmp.eq.s32.totalorder %s9, 0
      %p29 = por %p27, %p28
      %p30 = scmp.ne.s32.totalorder %s19, %s22
      %p31 = scmp.eq.s32.totalorder %s14, 1
      %p32 = por %p30, %p31
      %p33 = scmp.ne.s32.totalorder %s22, %s23
      %p34 = scmp.eq.s32.totalorder %s14, 0
      %p35 = por %p33, %p34
      %p36 = scmp.ne.s32.totalorder %s22, %s23
      %p37 = scmp.eq.s32.totalorder %s15, 1
      %p38 = por %p36, %p37
      %p40 = scmp.ne.s32.totalorder %s23, %s39
      %p41 = scmp.eq.s32.totalorder %s15, 0
      %p42 = por %p40, %p41
      %s44 = sadd.s32 %s43, 1
      %p47 = scmp.eq.s32.totalorder %s9, 1
      %p48 = scmp.ne.s32.totalorder %s43, %s45
      %p49 = scmp.eq.s32.totalorder %s9, 0
      %p50 = por %p48, %p49
      %p51 = scmp.ne.s32.totalorder %s43, %s45
      %p52 = scmp.eq.s32.totalorder %s14, 1
      %p53 = por %p51, %p52
      %p54 = scmp.ne.s32.totalorder %s45, %s46
      %p55 = scmp.eq.s32.totalorder %s14, 0
      %p56 = por %p54, %p55
      %p57 = scmp.ne.s32.totalorder %s45, %s46
      %p58 = scmp.eq.s32.totalorder %s15, 1
      %p59 = por %p57, %p58
      %p61 = scmp.ne.s32.totalorder %s46, %s60
      %p62 = scmp.eq.s32.totalorder %s15, 0
      %p63 = por %p61, %p62
      %s65 = sadd.s32 %s64, 1
      %p68 = scmp.eq.s32.totalorder %s9, 1
      %p69 = scmp.ne.s32.totalorder %s64, %s66
      %p70 = scmp.eq.s32.totalorder %s9, 0
      %p71 = por %p69, %p70
      %p72 = scmp.ne.s32.totalorder %s64, %s66
      %p73 = scmp.eq.s32.totalorder %s14, 1
      %p74 = por %p72, %p73
      %p75 = scmp.ne.s32.totalorder %s66, %s67
      %p76 = scmp.eq.s32.totalorder %s14, 0
      %p77 = por %p75, %p76
      %p78 = scmp.ne.s32.totalorder %s66, %s67
      %p79 = scmp.eq.s32.totalorder %s15, 1
      %p80 = por %p78, %p79
      %p82 = scmp.ne.s32.totalorder %s67, %s81
      %p83 = scmp.eq.s32.totalorder %s15, 0
      %p84 = por %p82, %p83
      %s85 = ssub.s32 %s9, %s16
      %p86 = scmp.eq.s32.totalorder %s85, 0
      %s88 = sadd.s32 %s87, 1
      %s89 = scalar_select %p86, %s87, %s88
      %p92 = pneg %p86
      %p93 = scmp.eq.s32.totalorder %s9, 1
      %p94 = por %p92, %p93
      %p95 = scmp.ne.s32.totalorder %s87, %s90
      %p96 = scmp.eq.s32.totalorder %s9, 0
      %p97 = por %p95, %p96
      %p98 = scmp.ne.s32.totalorder %s87, %s90
      %p99 = scmp.eq.s32.totalorder %s14, 1
      %p100 = por %p98, %p99
      %p101 = scmp.ne.s32.totalorder %s90, %s91
      %p102 = scmp.eq.s32.totalorder %s14, 0
      %p103 = por %p101, %p102
      %p104 = scmp.ne.s32.totalorder %s90, %s91
      %p105 = scmp.eq.s32.totalorder %s15, 1
      %p106 = por %p104, %p105
      %p108 = scmp.ne.s32.totalorder %s91, %s107
      %p109 = scmp.eq.s32.totalorder %s15, 0
      %p110 = por %p108, %p109
      %p111 = scmp.le.s32.totalorder 1, %s9
      %p112 = scmp.lt.s32.totalorder %s9, 3
      %p113 = pnand %p111, %p112
      %p114 = pneg %p113
      // Predicated region
      $region9: #{gan_forward.3} parent=5 // pred_check
        _
      $region10: #{gan_forward.3} parent=5 // pred_check_branch
        %116 = sbr.rel (%p113) target = $region12
      $region11: #{gan_forward.3} parent=5 // pred_region
        %s117 = ssub.s32 %s9, 1
        // Predicated region
        $region13: #{gan_forward.3} parent=11 // pred_check
          %p118 = pneg %p56
        $region14: #{gan_forward.3} parent=11 // pred_check_branch
          %120 = sbr.rel (%p118) target = $region16
        $region15: #{gan_forward.3} parent=11 // pred_region
          _
        $region16: #{gan_forward.3} parent=11 // pred_fallthru
          _
        // Predicated region
        $region17: #{gan_forward.3} parent=11 // pred_check
          %p121 = pneg %p77
        $region18: #{gan_forward.3} parent=11 // pred_check_branch
          %123 = sbr.rel (%p121) target = $region20
        $region19: #{gan_forward.3} parent=11 // pred_region
          _
        $region20: #{gan_forward.3} parent=11 // pred_fallthru
          _
      $region12: #{gan_forward.3} parent=5 // pred_fallthru
        _
      %p124 = scmp.lt.s32.totalorder %s9, 2
      // Predicated region
      $region21: #{gan_forward.3} parent=5 // pred_check
        %p125 = pneg %p124
      $region22: #{gan_forward.3} parent=5 // pred_check_branch
        %127 = sbr.rel (%p125) target = $region24
      $region23: #{gan_forward.3} parent=5 // pred_region
        // Predicated region
        $region25: #{gan_forward.3} parent=23 // pred_check
          %p128 = pneg %p29
        $region26: #{gan_forward.3} parent=23 // pred_check_branch
          %130 = sbr.rel (%p128) target = $region28
        $region27: #{gan_forward.3} parent=23 // pred_region
          %s131 = sand.u32 %s19, 1
          %s132 = sand.u32 %s19, 1
          %s133 = smul.addr %s132, 224
          %s134 = scalar_lea.vmem [#allocation2], %s133
          %s135 = smul.u32 8, %s9
          %s136 = smul.addr %s135, 4
          %s137 = scalar_lea.vmem %s0, %s136
          // Predicated region
          $region29: #{gan_forward.3} parent=27 // pred_check
            _
          $region30: #{gan_forward.3} parent=27 // pred_check_branch
            %139 = sbr.rel (0) target = $region32
          $region31: #{gan_forward.3} parent=27 // pred_region
            // Predicated region
            $region33: #{gan_forward.3} parent=31 // pred_check
              _
            $region34: #{gan_forward.3} parent=31 // pred_check_branch
              %141 = sbr.rel (0) target = $region36
            $region35: #{gan_forward.3} parent=31 // pred_region
              loop: start=0, step=1, limit=1
              $region37: #{gan_forward.3} parent=35 // loop_pre_header
                _
              $region38: #{gan_forward.3} parent=35 // loop_header
                %s143 = sphi 0, %s147
                %p144 = scmp.ge.s32.totalorder %s143, 1
                %s148 = sphi %s137, %s137
                %s149 = sphi %s134, %s134
              $region39: #{gan_forward.3} parent=35 // loop_header_branch
                %146 = sbr.rel (%p144) target = $region43
              $region40: #{gan_forward.3} parent=35 // loop_body
                %v150 = vld [vmem:[%s148] sm:$0xff]
                %151 = vst [vmem:[%s149] sm:$0xff] %v150
                %v152 = vld [vmem:[%s148 + $0x8] sm:$0xff]
                %153 = vst [vmem:[%s149 + $0x8] sm:$0xff] %v152
                %v154 = vld [vmem:[%s148 + $0x10] sm:$0xff]
                %155 = vst [vmem:[%s149 + $0x10] sm:$0xff] %v154
                %v156 = vld [vmem:[%s148 + $0x18] sm:$0xff]
                %157 = vst [vmem:[%s149 + $0x18] sm:$0xff] %v156
                %v158 = vld [vmem:[%s148 + $0x40] sm:$0xff]
                %159 = vst [vmem:[%s149 + $0x20] sm:$0xff] %v158
                %v160 = vld [vmem:[%s148 + $0x48] sm:$0xff]
                %161 = vst [vmem:[%s149 + $0x28] sm:$0xff] %v160
                %v162 = vld [vmem:[%s148 + $0x50] sm:$0xff]
                %163 = vst [vmem:[%s149 + $0x30] sm:$0xff] %v162
                %v164 = vld [vmem:[%s148 + $0x58] sm:$0xff]
                %165 = vst [vmem:[%s149 + $0x38] sm:$0xff] %v164
                %v166 = vld [vmem:[%s148 + $0x80] sm:$0xff]
                %167 = vst [vmem:[%s149 + $0x40] sm:$0xff] %v166
                %v168 = vld [vmem:[%s148 + $0x88] sm:$0xff]
                %169 = vst [vmem:[%s149 + $0x48] sm:$0xff] %v168
                %v170 = vld [vmem:[%s148 + $0x90] sm:$0xff]
                %171 = vst [vmem:[%s149 + $0x50] sm:$0xff] %v170
                %v172 = vld [vmem:[%s148 + $0x98] sm:$0xff]
                %173 = vst [vmem:[%s149 + $0x58] sm:$0xff] %v172
                %v174 = vld [vmem:[%s148 + $0xc0] sm:$0xff]
                %175 = vst [vmem:[%s149 + $0x60] sm:$0xff] %v174
                %v176 = vld [vmem:[%s148 + $0xc8] sm:$0xff]
                %177 = vst [vmem:[%s149 + $0x68] sm:$0xff] %v176
                %v178 = vld [vmem:[%s148 + $0xd0] sm:$0xff]
                %179 = vst [vmem:[%s149 + $0x70] sm:$0xff] %v178
                %v180 = vld [vmem:[%s148 + $0xd8] sm:$0xff]
                %181 = vst [vmem:[%s149 + $0x78] sm:$0xff] %v180
                %v182 = vld [vmem:[%s148 + $0x100] sm:$0xff]
                %183 = vst [vmem:[%s149 + $0x80] sm:$0xff] %v182
                %v184 = vld [vmem:[%s148 + $0x108] sm:$0xff]
                %185 = vst [vmem:[%s149 + $0x88] sm:$0xff] %v184
                %v186 = vld [vmem:[%s148 + $0x110] sm:$0xff]
                %187 = vst [vmem:[%s149 + $0x90] sm:$0xff] %v186
                %v188 = vld [vmem:[%s148 + $0x118] sm:$0xff]
                %189 = vst [vmem:[%s149 + $0x98] sm:$0xff] %v188
                %v190 = vld [vmem:[%s148 + $0x140] sm:$0xff]
                %191 = vst [vmem:[%s149 + $0xa0] sm:$0xff] %v190
                %v192 = vld [vmem:[%s148 + $0x148] sm:$0xff]
                %193 = vst [vmem:[%s149 + $0xa8] sm:$0xff] %v192
                %v194 = vld [vmem:[%s148 + $0x150] sm:$0xff]
                %195 = vst [vmem:[%s149 + $0xb0] sm:$0xff] %v194
                %v196 = vld [vmem:[%s148 + $0x158] sm:$0xff]
                %197 = vst [vmem:[%s149 + $0xb8] sm:$0xff] %v196
                %v198 = vld [vmem:[%s148 + $0x180] sm:$0xff]
                %199 = vst [vmem:[%s149 + $0xc0] sm:$0xff] %v198
                %v200 = vld [vmem:[%s148 + $0x188] sm:$0xff]
                %201 = vst [vmem:[%s149 + $0xc8] sm:$0xff] %v200
                %v202 = vld [vmem:[%s148 + $0x190] sm:$0xff]
                %203 = vst [vmem:[%s149 + $0xd0] sm:$0xff] %v202
                %v204 = vld [vmem:[%s148 + $0x198] sm:$0xff]
                %205 = vst [vmem:[%s149 + $0xd8] sm:$0xff] %v204
              $region41: #{gan_forward.3} parent=35 // loop_footer
                %s147 = sadd.s32 1, %s143
              $region42: #{gan_forward.3} parent=35 // loop_footer_branch
                %142 = sbr.rel target = $region38
              $region43: #{gan_forward.3} parent=35 // loop_exit
                _
            $region36: #{gan_forward.3} parent=31 // pred_fallthru
              _
            // Predicated region
            $region44: #{gan_forward.3} parent=31 // pred_check
              _
            $region45: #{gan_forward.3} parent=31 // pred_check_branch
              %207 = sbr.rel target = $region47
            $region46: #{gan_forward.3} parent=31 // pred_region
              _
            $region47: #{gan_forward.3} parent=31 // pred_fallthru
              _
          $region32: #{gan_forward.3} parent=27 // pred_fallthru
            _
          %208 = vnop
        $region28: #{gan_forward.3} parent=23 // pred_fallthru
          _
      $region24: #{gan_forward.3} parent=5 // pred_fallthru
        _
      %p209 = scmp.le.s32.totalorder 1, %s9
      %p210 = scmp.lt.s32.totalorder %s9, 3
      %p211 = pnand %p209, %p210
      %p212 = pneg %p211
      // Predicated region
      $region48: #{gan_forward.3} parent=5 // pred_check
        _
      $region49: #{gan_forward.3} parent=5 // pred_check_branch
        %214 = sbr.rel (%p211) target = $region51
      $region50: #{gan_forward.3} parent=5 // pred_region
        %s215 = ssub.s32 %s9, 1
        %s216 = sand.u32 %s22, 1
        %s217 = sand.u32 %s22, 1
        %s218 = smul.addr %s217, 224
        %s219 = scalar_lea.vmem [#allocation2], %s218
        // Predicated region
        $region52: #{gan_forward.3} parent=50 // pred_check
          %p220 = pneg %p35
        $region53: #{gan_forward.3} parent=50 // pred_check_branch
          %222 = sbr.rel (%p220) target = $region55
        $region54: #{gan_forward.3} parent=50 // pred_region
          _
        $region55: #{gan_forward.3} parent=50 // pred_fallthru
          _
        %s223 = sand.u32 %s22, 1
        %s224 = sand.u32 %s22, 1
        %s225 = smul.addr %s224, 224
        %s226 = scalar_lea.vmem [#allocation2], %s225
        %p227 = pneg %p35
        %p228 = pneg %p32
        %p229 = pneg %p56
        %p230 = pneg %p53
        %p231 = pneg %p77
        %p232 = pneg %p74
        %p233 = pneg %p103
        %p234 = pneg %p100
        %s235 = sand.u32 %s90, 1
        %s236 = sand.u32 %s90, 1
        %s237 = smul.addr %s236, 192
        %s238 = scalar_lea.vmem [#allocation3], %s237
        %s239 = smul.u32 8, %s14
        %s240 = smul.u32 8, %s14
        %v242 = vld [vmem:[%s1] sm:$0xf]
        %v243 = vld [vmem:[%s1 + $0x4] sm:$0xf]
        %v244 = vld [vmem:[%s1 + $0x8] sm:$0xf]
        %v245 = vld [vmem:[%s219] sm:$0xff]
        %v246 = vld [vmem:[%s219 + $0x8] sm:$0xff]
        %v247 = vld [vmem:[%s219 + $0x10] sm:$0xff]
        %v248 = vld [vmem:[%s219 + $0x18] sm:$0xff]
        %v249 = vld [vmem:[%s219 + $0x20] sm:$0xff]
        %v250 = vld [vmem:[%s219 + $0x28] sm:$0xff]
        %v251 = vld [vmem:[%s219 + $0x30] sm:$0xff]
        %v252 = vld [vmem:[%s219 + $0x38] sm:$0xff]
        %v253 = vld [vmem:[%s219 + $0x40] sm:$0xff]
        %v254 = vld [vmem:[%s219 + $0x48] sm:$0xff]
        %v255 = vld [vmem:[%s219 + $0x50] sm:$0xff]
        %v256 = vld [vmem:[%s219 + $0x58] sm:$0xff]
        %v257 = vld [vmem:[%s219 + $0x60] sm:$0xff]
        %v258 = vld [vmem:[%s219 + $0x68] sm:$0xff]
        %v259 = vld [vmem:[%s219 + $0x70] sm:$0xff]
        %v260 = vld [vmem:[%s219 + $0x78] sm:$0xff]
        %v261 = vld [vmem:[%s219 + $0x80] sm:$0xff]
        %v262 = vld [vmem:[%s219 + $0x88] sm:$0xff]
        %v263 = vld [vmem:[%s219 + $0x90] sm:$0xff]
        %v264 = vld [vmem:[%s219 + $0x98] sm:$0xff]
        %v265 = vld [vmem:[%s219 + $0xa0] sm:$0xff]
        %v266 = vld [vmem:[%s219 + $0xa8] sm:$0xff]
        %v267 = vld [vmem:[%s219 + $0xb0] sm:$0xff]
        %v268 = vld [vmem:[%s219 + $0xb8] sm:$0xff]
        %v269 = vld [vmem:[%s219 + $0xc0] sm:$0x77]
        %v270 = vld [vmem:[%s219 + $0xc8] sm:$0x77]
        %v271 = vld [vmem:[%s219 + $0xd0] sm:$0x77]
        %v272 = vld [vmem:[%s219 + $0xd8] sm:$0x77]
        %v273 = vld [vmem:[%s2] sm:$0xff]
        %v274 = vld [vmem:[%s2 + $0x8] sm:$0xff]
        %v275 = vld [vmem:[%s2 + $0x10] sm:$0xff]
        %277 = vset.pattern.permute.xlu0 0
        %278 = vperm.xlu0 %277, %v273
        %v279 = vpop.permute.xlu0 %278
        %282 = vset.pattern.permute.xlu0 0
        %283 = vperm.xlu0 %282, %v274
        %v284 = vpop.permute.xlu0 %283
        %287 = vset.pattern.permute.xlu0 0
        %288 = vperm.xlu0 %287, %v275
        %v289 = vpop.permute.xlu0 %288
        %v294 = vunpack.c.l.b16 %v242
        %v295 = vunpack.c.l.b16 %v243
        %v296 = vunpack.c.l.b16 %v244
        %v297 = vpack.c.b16 %v295, %v294
        %v298 = vpack.c.b16 %v296, %v296
        %v327 = vunpack.c.l.b16 %v245
        %v328 = vunpack.c.h.b16 %v245
        %v329 = vunpack.c.l.b16 %v246
        %v330 = vunpack.c.h.b16 %v246
        %v331 = vunpack.c.l.b16 %v247
        %v332 = vunpack.c.h.b16 %v247
        %v333 = vunpack.c.l.b16 %v248
        %v334 = vunpack.c.h.b16 %v248
        %v335 = vunpack.c.l.b16 %v249
        %v336 = vunpack.c.h.b16 %v249
        %v337 = vunpack.c.l.b16 %v250
        %v338 = vunpack.c.h.b16 %v250
        %v339 = vunpack.c.l.b16 %v251
        %v340 = vunpack.c.h.b16 %v251
        %v341 = vunpack.c.l.b16 %v252
        %v342 = vunpack.c.h.b16 %v252
        %v343 = vunpack.c.l.b16 %v253
        %v344 = vunpack.c.h.b16 %v253
        %v345 = vunpack.c.l.b16 %v254
        %v346 = vunpack.c.h.b16 %v254
        %v347 = vunpack.c.l.b16 %v255
        %v348 = vunpack.c.h.b16 %v255
        %v349 = vunpack.c.l.b16 %v256
        %v350 = vunpack.c.h.b16 %v256
        %v351 = vunpack.c.l.b16 %v257
        %v352 = vunpack.c.h.b16 %v257
        %v353 = vunpack.c.l.b16 %v258
        %v354 = vunpack.c.h.b16 %v258
        %v355 = vunpack.c.l.b16 %v259
        %v356 = vunpack.c.h.b16 %v259
        %v357 = vunpack.c.l.b16 %v260
        %v358 = vunpack.c.h.b16 %v260
        %v359 = vunpack.c.l.b16 %v261
        %v360 = vunpack.c.h.b16 %v261
        %v361 = vunpack.c.l.b16 %v262
        %v362 = vunpack.c.h.b16 %v262
        %v363 = vunpack.c.l.b16 %v263
        %v364 = vunpack.c.h.b16 %v263
        %v365 = vunpack.c.l.b16 %v264
        %v366 = vunpack.c.h.b16 %v264
        %v367 = vunpack.c.l.b16 %v265
        %v368 = vunpack.c.h.b16 %v265
        %v369 = vunpack.c.l.b16 %v266
        %v370 = vunpack.c.h.b16 %v266
        %v371 = vunpack.c.l.b16 %v267
        %v372 = vunpack.c.h.b16 %v267
        %v373 = vunpack.c.l.b16 %v268
        %v374 = vunpack.c.h.b16 %v268
        %v375 = vunpack.c.l.b16 %v269
        %v376 = vunpack.c.h.b16 %v269
        %v377 = vunpack.c.l.b16 %v270
        %v378 = vunpack.c.h.b16 %v270
        %v379 = vunpack.c.l.b16 %v271
        %v380 = vunpack.c.h.b16 %v271
        %v381 = vunpack.c.l.b16 %v272
        %v382 = vunpack.c.h.b16 %v272
        %v383 = vpack.c.b16 %v335, %v327
        %v384 = vpack.c.b16 %v336, %v328
        %v385 = vpack.c.b16 %v337, %v329
        %v386 = vpack.c.b16 %v338, %v330
        %v387 = vpack.c.b16 %v339, %v331
        %v388 = vpack.c.b16 %v340, %v332
        %v389 = vpack.c.b16 %v341, %v333
        %v390 = vpack.c.b16 %v342, %v334
        %v391 = vpack.c.b16 %v351, %v343
        %v392 = vpack.c.b16 %v352, %v344
        %v393 = vpack.c.b16 %v353, %v345
        %v394 = vpack.c.b16 %v354, %v346
        %v395 = vpack.c.b16 %v355, %v347
        %v396 = vpack.c.b16 %v356, %v348
        %v397 = vpack.c.b16 %v357, %v349
        %v398 = vpack.c.b16 %v358, %v350
        %v399 = vpack.c.b16 %v367, %v359
        %v400 = vpack.c.b16 %v368, %v360
        %v401 = vpack.c.b16 %v369, %v361
        %v402 = vpack.c.b16 %v370, %v362
        %v403 = vpack.c.b16 %v371, %v363
        %v404 = vpack.c.b16 %v372, %v364
        %v405 = vpack.c.b16 %v373, %v365
        %v406 = vpack.c.b16 %v374, %v366
        %v407 = vpack.c.b16 %v375, %v375
        %v408 = vpack.c.b16 %v376, %v376
        %v409 = vpack.c.b16 %v377, %v377
        %v410 = vpack.c.b16 %v378, %v378
        %v411 = vpack.c.b16 %v379, %v379
        %v412 = vpack.c.b16 %v380, %v380
        %v413 = vpack.c.b16 %v381, %v381
        %v414 = vpack.c.b16 %v382, %v382
        %vm439 = vcmask 441344
        %v441 = vsel %vm439, %v297, 0
        %v444 = vsel %vm439, %v298, 0
        %vm446 = vcmask 1042432
        %v448 = vsel %vm446, %v407, 0
        %v451 = vsel %vm446, %v408, 0
        %v454 = vsel %vm446, %v409, 0
        %v457 = vsel %vm446, %v410, 0
        %v460 = vsel %vm446, %v411, 0
        %v463 = vsel %vm446, %v412, 0
        %v466 = vsel %vm446, %v413, 0
        %v469 = vsel %vm446, %v414, 0
        %471 = vmatprep.subr.bf16.mxu0 0
        %472 = vmatpush1.bf16.msra.mxu0 0
        %473 = vmatprep.subr.bf16.mxu0 0
        %474 = vmatpush1.bf16.msra.mxu0 0
        %475 = vmatprep.subr.bf16.mxu0 0
        %476 = vmatpush1.bf16.msra.mxu0 0
        %477 = vmatprep.subr.bf16.mxu0 0
        %478 = vmatpush1.bf16.msra.mxu0 0
        %479 = vmatprep.subr.bf16.mxu0 %v451
        %480 = vmatpush1.bf16.msra.mxu0 %v448
        %481 = vmatprep.subr.bf16.mxu0 %v400
        %482 = vmatpush1.bf16.msra.mxu0 %v399
        %483 = vmatprep.subr.bf16.mxu0 %v392
        %484 = vmatpush1.bf16.msra.mxu0 %v391
        %485 = vmatprep.subr.bf16.mxu0 %v384
        %486 = vmatpush1.bf16.msra.mxu0 %v383
        %487 = vmatprep.subr.bf16.mxu0 0
        %488 = vmatpush2.bf16.msra.mxu0 0
        %489 = vmatprep.subr.bf16.mxu0 0
        %490 = vmatpush2.bf16.msra.mxu0 0
        %491 = vmatprep.subr.bf16.mxu0 0
        %492 = vmatpush2.bf16.msra.mxu0 0
        %493 = vmatprep.subr.bf16.mxu0 0
        %494 = vmatpush2.bf16.msra.mxu0 0
        %495 = vmatprep.subr.bf16.mxu0 0
        %496 = vmatpush2.bf16.msra.mxu0 0
        %497 = vmatprep.subr.bf16.mxu0 0
        %498 = vmatpush2.bf16.msra.mxu0 0
        %499 = vmatprep.subr.bf16.mxu0 0
        %500 = vmatpush2.bf16.msra.mxu0 0
        %501 = vmatprep.subr.bf16.mxu0 0
        %502 = vmatpush2.bf16.msra.mxu0 0
        %503 = vmatprep.mubr.bf16.mxu0 0
        %504 = vmatmul.mubr.bf16.gmra.mxu0 %v441
        %v505 = vpop.f32.mrf.mxu0
        %v506 = vadd.f32 %v279, %v505
        %v507 = vpop.f32.mrf.mxu0
        %v508 = vadd.f32 %v279, %v507
        %v509 = vpop.f32.mrf.mxu0
        %v510 = vadd.f32 %v284, %v509
        %v511 = vpop.f32.mrf.mxu0
        %v512 = vadd.f32 %v284, %v511
        %513 = vmatprep.mubr.bf16.mxu0 0
        %514 = vmatmul.mubr.bf16.gmra.mxu0 %v444
        %v515 = vpop.f32.mrf.mxu0
        %v516 = vadd.f32 %v289, %v515
        %v517 = vpop.f32.mrf.mxu0
        %v518 = vadd.f32 %v289, %v517
        %v519 = vpop.f32.mrf.mxu0
        %v520 = vpop.f32.mrf.mxu0
        %521 = vdwg.mxu0
        %522 = vmatprep.subr.bf16.mxu0 0
        %523 = vmatpush1.bf16.msra.mxu0 0
        %524 = vmatprep.subr.bf16.mxu0 0
        %525 = vmatpush1.bf16.msra.mxu0 0
        %526 = vmatprep.subr.bf16.mxu0 0
        %527 = vmatpush1.bf16.msra.mxu0 0
        %528 = vmatprep.subr.bf16.mxu0 0
        %529 = vmatpush1.bf16.msra.mxu0 0
        %530 = vmatprep.subr.bf16.mxu0 %v457
        %531 = vmatpush1.bf16.msra.mxu0 %v454
        %532 = vmatprep.subr.bf16.mxu0 %v402
        %533 = vmatpush1.bf16.msra.mxu0 %v401
        %534 = vmatprep.subr.bf16.mxu0 %v394
        %535 = vmatpush1.bf16.msra.mxu0 %v393
        %536 = vmatprep.subr.bf16.mxu0 %v386
        %537 = vmatpush1.bf16.msra.mxu0 %v385
        %538 = vmatprep.subr.bf16.mxu0 0
        %539 = vmatpush2.bf16.msra.mxu0 0
        %540 = vmatprep.subr.bf16.mxu0 0
        %541 = vmatpush2.bf16.msra.mxu0 0
        %542 = vmatprep.subr.bf16.mxu0 0
        %543 = vmatpush2.bf16.msra.mxu0 0
        %544 = vmatprep.subr.bf16.mxu0 0
        %545 = vmatpush2.bf16.msra.mxu0 0
        %546 = vmatprep.subr.bf16.mxu0 0
        %547 = vmatpush2.bf16.msra.mxu0 0
        %548 = vmatprep.subr.bf16.mxu0 0
        %549 = vmatpush2.bf16.msra.mxu0 0
        %550 = vmatprep.subr.bf16.mxu0 0
        %551 = vmatpush2.bf16.msra.mxu0 0
        %552 = vmatprep.subr.bf16.mxu0 0
        %553 = vmatpush2.bf16.msra.mxu0 0
        %554 = vmatprep.mubr.bf16.mxu0 0
        %555 = vmatmul.mubr.bf16.gmra.mxu0 %v441
        %v556 = vpop.f32.mrf.mxu0
        %v557 = vadd.f32 %v279, %v556
        %v558 = vpop.f32.mrf.mxu0
        %v559 = vadd.f32 %v279, %v558
        %v560 = vpop.f32.mrf.mxu0
        %v561 = vadd.f32 %v284, %v560
        %v562 = vpop.f32.mrf.mxu0
        %v563 = vadd.f32 %v284, %v562
        %564 = vmatprep.mubr.bf16.mxu0 0
        %565 = vmatmul.mubr.bf16.gmra.mxu0 %v444
        %v566 = vpop.f32.mrf.mxu0
        %v567 = vadd.f32 %v289, %v566
        %v568 = vpop.f32.mrf.mxu0
        %v569 = vadd.f32 %v289, %v568
        %v570 = vpop.f32.mrf.mxu0
        %v571 = vpop.f32.mrf.mxu0
        %572 = vdwg.mxu0
        %573 = vmatprep.subr.bf16.mxu0 0
        %574 = vmatpush1.bf16.msra.mxu0 0
        %575 = vmatprep.subr.bf16.mxu0 0
        %576 = vmatpush1.bf16.msra.mxu0 0
        %577 = vmatprep.subr.bf16.mxu0 0
        %578 = vmatpush1.bf16.msra.mxu0 0
        %579 = vmatprep.subr.bf16.mxu0 0
        %580 = vmatpush1.bf16.msra.mxu0 0
        %581 = vmatprep.subr.bf16.mxu0 %v463
        %582 = vmatpush1.bf16.msra.mxu0 %v460
        %583 = vmatprep.subr.bf16.mxu0 %v404
        %584 = vmatpush1.bf16.msra.mxu0 %v403
        %585 = vmatprep.subr.bf16.mxu0 %v396
        %586 = vmatpush1.bf16.msra.mxu0 %v395
        %587 = vmatprep.subr.bf16.mxu0 %v388
        %588 = vmatpush1.bf16.msra.mxu0 %v387
        %589 = vmatprep.subr.bf16.mxu0 0
        %590 = vmatpush2.bf16.msra.mxu0 0
        %591 = vmatprep.subr.bf16.mxu0 0
        %592 = vmatpush2.bf16.msra.mxu0 0
        %593 = vmatprep.subr.bf16.mxu0 0
        %594 = vmatpush2.bf16.msra.mxu0 0
        %595 = vmatprep.subr.bf16.mxu0 0
        %596 = vmatpush2.bf16.msra.mxu0 0
        %597 = vmatprep.subr.bf16.mxu0 0
        %598 = vmatpush2.bf16.msra.mxu0 0
        %599 = vmatprep.subr.bf16.mxu0 0
        %600 = vmatpush2.bf16.msra.mxu0 0
        %601 = vmatprep.subr.bf16.mxu0 0
        %602 = vmatpush2.bf16.msra.mxu0 0
        %603 = vmatprep.subr.bf16.mxu0 0
        %604 = vmatpush2.bf16.msra.mxu0 0
        %605 = vmatprep.mubr.bf16.mxu0 0
        %606 = vmatmul.mubr.bf16.gmra.mxu0 %v441
        %v607 = vpop.f32.mrf.mxu0
        %v608 = vadd.f32 %v279, %v607
        %v609 = vpop.f32.mrf.mxu0
        %v610 = vadd.f32 %v279, %v609
        %v611 = vpop.f32.mrf.mxu0
        %v612 = vadd.f32 %v284, %v611
        %v613 = vpop.f32.mrf.mxu0
        %v614 = vadd.f32 %v284, %v613
        %615 = vmatprep.mubr.bf16.mxu0 0
        %616 = vmatmul.mubr.bf16.gmra.mxu0 %v444
        %v617 = vpop.f32.mrf.mxu0
        %v618 = vadd.f32 %v289, %v617
        %v619 = vpop.f32.mrf.mxu0
        %v620 = vadd.f32 %v289, %v619
        %v621 = vpop.f32.mrf.mxu0
        %v622 = vpop.f32.mrf.mxu0
        %623 = vdwg.mxu0
        %624 = vmatprep.subr.bf16.mxu0 0
        %625 = vmatpush1.bf16.msra.mxu0 0
        %626 = vmatprep.subr.bf16.mxu0 0
        %627 = vmatpush1.bf16.msra.mxu0 0
        %628 = vmatprep.subr.bf16.mxu0 0
        %629 = vmatpush1.bf16.msra.mxu0 0
        %630 = vmatprep.subr.bf16.mxu0 0
        %631 = vmatpush1.bf16.msra.mxu0 0
        %632 = vmatprep.subr.bf16.mxu0 %v469
        %633 = vmatpush1.bf16.msra.mxu0 %v466
        %634 = vmatprep.subr.bf16.mxu0 %v406
        %635 = vmatpush1.bf16.msra.mxu0 %v405
        %636 = vmatprep.subr.bf16.mxu0 %v398
        %637 = vmatpush1.bf16.msra.mxu0 %v397
        %638 = vmatprep.subr.bf16.mxu0 %v390
        %639 = vmatpush1.bf16.msra.mxu0 %v389
        %640 = vmatprep.subr.bf16.mxu0 0
        %641 = vmatpush2.bf16.msra.mxu0 0
        %642 = vmatprep.subr.bf16.mxu0 0
        %643 = vmatpush2.bf16.msra.mxu0 0
        %644 = vmatprep.subr.bf16.mxu0 0
        %645 = vmatpush2.bf16.msra.mxu0 0
        %646 = vmatprep.subr.bf16.mxu0 0
        %647 = vmatpush2.bf16.msra.mxu0 0
        %648 = vmatprep.subr.bf16.mxu0 0
        %649 = vmatpush2.bf16.msra.mxu0 0
        %650 = vmatprep.subr.bf16.mxu0 0
        %651 = vmatpush2.bf16.msra.mxu0 0
        %652 = vmatprep.subr.bf16.mxu0 0
        %653 = vmatpush2.bf16.msra.mxu0 0
        %654 = vmatprep.subr.bf16.mxu0 0
        %655 = vmatpush2.bf16.msra.mxu0 0
        %656 = vmatprep.mubr.bf16.mxu0 0
        %657 = vmatmul.mubr.bf16.gmra.mxu0 %v441
        %v658 = vpop.f32.mrf.mxu0
        %v659 = vadd.f32 %v279, %v658
        %v660 = vpop.f32.mrf.mxu0
        %v661 = vadd.f32 %v279, %v660
        %v662 = vpop.f32.mrf.mxu0
        %v663 = vadd.f32 %v284, %v662
        %v664 = vpop.f32.mrf.mxu0
        %v665 = vadd.f32 %v284, %v664
        %666 = vmatprep.mubr.bf16.mxu0 0
        %667 = vmatmul.mubr.bf16.gmra.mxu0 %v444
        %v668 = vpop.f32.mrf.mxu0
        %v669 = vadd.f32 %v289, %v668
        %v670 = vpop.f32.mrf.mxu0
        %v671 = vadd.f32 %v289, %v670
        %v672 = vpop.f32.mrf.mxu0
        %v673 = vpop.f32.mrf.mxu0
        %674 = vdwg.mxu0
        %v675 = vlaneseq
        %v676 = vshrl.u32 %v675, 7
        %v677 = vadd.s32 %v676, 8
        %v678 = vadd.s32 %v676, 16
        %vm679 = vcmp.lt.s32.totalorder %v676, 3
        %vm680 = vcmp.lt.s32.totalorder %v677, 3
        %vm681 = vcmp.lt.s32.totalorder %v678, 3
        %v682 = vtanh.pop %v506
        %v683 = vtanh.pop %v508
        %v684 = vtanh.pop %v557
        %v685 = vtanh.pop %v559
        %v686 = vtanh.pop %v608
        %v687 = vtanh.pop %v610
        %v688 = vtanh.pop %v659
        %v689 = vtanh.pop %v661
        %v690 = vtanh.pop %v510
        %v691 = vtanh.pop %v512
        %v692 = vtanh.pop %v561
        %v693 = vtanh.pop %v563
        %v694 = vtanh.pop %v612
        %v695 = vtanh.pop %v614
        %v696 = vtanh.pop %v663
        %v697 = vtanh.pop %v665
        %v698 = vtanh.pop %v516
        %v699 = vtanh.pop %v518
        %v700 = vtanh.pop %v567
        %v701 = vtanh.pop %v569
        %v702 = vtanh.pop %v618
        %v703 = vtanh.pop %v620
        %v704 = vtanh.pop %v669
        %v705 = vtanh.pop %v671
        %v706 = vsel %vm679, %v682, %v506
        %v707 = vsel %vm679, %v683, %v508
        %v708 = vsel %vm679, %v684, %v557
        %v709 = vsel %vm679, %v685, %v559
        %v710 = vsel %vm679, %v686, %v608
        %v711 = vsel %vm679, %v687, %v610
        %v712 = vsel %vm679, %v688, %v659
        %v713 = vsel %vm679, %v689, %v661
        %v714 = vsel %vm680, %v690, %v510
        %v715 = vsel %vm680, %v691, %v512
        %v716 = vsel %vm680, %v692, %v561
        %v717 = vsel %vm680, %v693, %v563
        %v718 = vsel %vm680, %v694, %v612
        %v719 = vsel %vm680, %v695, %v614
        %v720 = vsel %vm680, %v696, %v663
        %v721 = vsel %vm680, %v697, %v665
        %v722 = vsel %vm681, %v698, %v516
        %v723 = vsel %vm681, %v699, %v518
        %v724 = vsel %vm681, %v700, %v567
        %v725 = vsel %vm681, %v701, %v569
        %v726 = vsel %vm681, %v702, %v618
        %v727 = vsel %vm681, %v703, %v620
        %v728 = vsel %vm681, %v704, %v669
        %v729 = vsel %vm681, %v705, %v671
        %730 = vst [vmem:[%s238] sm:$0xff] %v706
        %731 = vst [vmem:[%s238 + $0x8] sm:$0xff] %v707
        %732 = vst [vmem:[%s238 + $0x10] sm:$0xff] %v708
        %733 = vst [vmem:[%s238 + $0x18] sm:$0xff] %v709
        %734 = vst [vmem:[%s238 + $0x20] sm:$0xff] %v710
        %735 = vst [vmem:[%s238 + $0x28] sm:$0xff] %v711
        %736 = vst [vmem:[%s238 + $0x30] sm:$0xff] %v712
        %737 = vst [vmem:[%s238 + $0x38] sm:$0xff] %v713
        %738 = vst [vmem:[%s238 + $0x40] sm:$0xff] %v714
        %739 = vst [vmem:[%s238 + $0x48] sm:$0xff] %v715
        %740 = vst [vmem:[%s238 + $0x50] sm:$0xff] %v716
        %741 = vst [vmem:[%s238 + $0x58] sm:$0xff] %v717
        %742 = vst [vmem:[%s238 + $0x60] sm:$0xff] %v718
        %743 = vst [vmem:[%s238 + $0x68] sm:$0xff] %v719
        %744 = vst [vmem:[%s238 + $0x70] sm:$0xff] %v720
        %745 = vst [vmem:[%s238 + $0x78] sm:$0xff] %v721
        %746 = vst [vmem:[%s238 + $0x80] sm:$0xff] %v722
        %747 = vst [vmem:[%s238 + $0x88] sm:$0xff] %v723
        %748 = vst [vmem:[%s238 + $0x90] sm:$0xff] %v724
        %749 = vst [vmem:[%s238 + $0x98] sm:$0xff] %v725
        %750 = vst [vmem:[%s238 + $0xa0] sm:$0xff] %v726
        %751 = vst [vmem:[%s238 + $0xa8] sm:$0xff] %v727
        %752 = vst [vmem:[%s238 + $0xb0] sm:$0xff] %v728
        %753 = vst [vmem:[%s238 + $0xb8] sm:$0xff] %v729
        %s754 = sand.u32 %s90, 1
        %s755 = sand.u32 %s90, 1
        %s756 = smul.addr %s755, 192
        %s757 = scalar_lea.vmem [#allocation3], %s756
        // Predicated region
        $region56: #{gan_forward.3} parent=50 // pred_check
          %p758 = pneg %p100
        $region57: #{gan_forward.3} parent=50 // pred_check_branch
          %760 = sbr.rel (%p758) target = $region59
        $region58: #{gan_forward.3} parent=50 // pred_region
          %s761 = smul.u32 8, %s14
          %s762 = smul.addr %s761, 8
          %s763 = scalar_lea.vmem %s3, %s762
          // Predicated region
          $region60: #{gan_forward.3} parent=58 // pred_check
            _
          $region61: #{gan_forward.3} parent=58 // pred_check_branch
            %765 = sbr.rel (0) target = $region63
          $region62: #{gan_forward.3} parent=58 // pred_region
            // Predicated region
            $region64: #{gan_forward.3} parent=62 // pred_check
              _
            $region65: #{gan_forward.3} parent=62 // pred_check_branch
              %767 = sbr.rel (0) target = $region67
            $region66: #{gan_forward.3} parent=62 // pred_region
              loop: start=0, step=1, limit=1
              $region68: #{gan_forward.3} parent=66 // loop_pre_header
                _
              $region69: #{gan_forward.3} parent=66 // loop_header
                %s769 = sphi 0, %s773
                %p770 = scmp.ge.s32.totalorder %s769, 1
                %s774 = sphi %s757, %s757
                %s775 = sphi %s763, %s763
              $region70: #{gan_forward.3} parent=66 // loop_header_branch
                %772 = sbr.rel (%p770) target = $region74
              $region71: #{gan_forward.3} parent=66 // loop_body
                %v776 = vld [vmem:[%s774] sm:$0xff]
                %777 = vst [vmem:[%s775] sm:$0xff] %v776
                %v778 = vld [vmem:[%s774 + $0x8] sm:$0xff]
                %779 = vst [vmem:[%s775 + $0x8] sm:$0xff] %v778
                %v780 = vld [vmem:[%s774 + $0x10] sm:$0xff]
                %781 = vst [vmem:[%s775 + $0x10] sm:$0xff] %v780
                %v782 = vld [vmem:[%s774 + $0x18] sm:$0xff]
                %783 = vst [vmem:[%s775 + $0x18] sm:$0xff] %v782
                %v784 = vld [vmem:[%s774 + $0x20] sm:$0xff]
                %785 = vst [vmem:[%s775 + $0x20] sm:$0xff] %v784
                %v786 = vld [vmem:[%s774 + $0x28] sm:$0xff]
                %787 = vst [vmem:[%s775 + $0x28] sm:$0xff] %v786
                %v788 = vld [vmem:[%s774 + $0x30] sm:$0xff]
                %789 = vst [vmem:[%s775 + $0x30] sm:$0xff] %v788
                %v790 = vld [vmem:[%s774 + $0x38] sm:$0xff]
                %791 = vst [vmem:[%s775 + $0x38] sm:$0xff] %v790
                %v792 = vld [vmem:[%s774 + $0x40] sm:$0xff]
                %793 = vst [vmem:[%s775 + $0x80] sm:$0xff] %v792
                %v794 = vld [vmem:[%s774 + $0x48] sm:$0xff]
                %795 = vst [vmem:[%s775 + $0x88] sm:$0xff] %v794
                %v796 = vld [vmem:[%s774 + $0x50] sm:$0xff]
                %797 = vst [vmem:[%s775 + $0x90] sm:$0xff] %v796
                %v798 = vld [vmem:[%s774 + $0x58] sm:$0xff]
                %799 = vst [vmem:[%s775 + $0x98] sm:$0xff] %v798
                %v800 = vld [vmem:[%s774 + $0x60] sm:$0xff]
                %801 = vst [vmem:[%s775 + $0xa0] sm:$0xff] %v800
                %v802 = vld [vmem:[%s774 + $0x68] sm:$0xff]
                %803 = vst [vmem:[%s775 + $0xa8] sm:$0xff] %v802
                %v804 = vld [vmem:[%s774 + $0x70] sm:$0xff]
                %805 = vst [vmem:[%s775 + $0xb0] sm:$0xff] %v804
                %v806 = vld [vmem:[%s774 + $0x78] sm:$0xff]
                %807 = vst [vmem:[%s775 + $0xb8] sm:$0xff] %v806
                %v808 = vld [vmem:[%s774 + $0x80] sm:$0xff]
                %809 = vst [vmem:[%s775 + $0x100] sm:$0xff] %v808
                %v810 = vld [vmem:[%s774 + $0x88] sm:$0xff]
                %811 = vst [vmem:[%s775 + $0x108] sm:$0xff] %v810
                %v812 = vld [vmem:[%s774 + $0x90] sm:$0xff]
                %813 = vst [vmem:[%s775 + $0x110] sm:$0xff] %v812
                %v814 = vld [vmem:[%s774 + $0x98] sm:$0xff]
                %815 = vst [vmem:[%s775 + $0x118] sm:$0xff] %v814
                %v816 = vld [vmem:[%s774 + $0xa0] sm:$0xff]
                %817 = vst [vmem:[%s775 + $0x120] sm:$0xff] %v816
                %v818 = vld [vmem:[%s774 + $0xa8] sm:$0xff]
                %819 = vst [vmem:[%s775 + $0x128] sm:$0xff] %v818
                %v820 = vld [vmem:[%s774 + $0xb0] sm:$0xff]
                %821 = vst [vmem:[%s775 + $0x130] sm:$0xff] %v820
                %v822 = vld [vmem:[%s774 + $0xb8] sm:$0xff]
                %823 = vst [vmem:[%s775 + $0x138] sm:$0xff] %v822
              $region72: #{gan_forward.3} parent=66 // loop_footer
                %s773 = sadd.s32 1, %s769
              $region73: #{gan_forward.3} parent=66 // loop_footer_branch
                %768 = sbr.rel target = $region69
              $region74: #{gan_forward.3} parent=66 // loop_exit
                _
            $region67: #{gan_forward.3} parent=62 // pred_fallthru
              _
            // Predicated region
            $region75: #{gan_forward.3} parent=62 // pred_check
              _
            $region76: #{gan_forward.3} parent=62 // pred_check_branch
              %825 = sbr.rel target = $region78
            $region77: #{gan_forward.3} parent=62 // pred_region
              _
            $region78: #{gan_forward.3} parent=62 // pred_fallthru
              _
          $region63: #{gan_forward.3} parent=58 // pred_fallthru
            _
          %826 = vnop
        $region59: #{gan_forward.3} parent=50 // pred_fallthru
          _
      $region51: #{gan_forward.3} parent=5 // pred_fallthru
        _
      %p827 = scmp.le.s32.totalorder 2, %s9
      // Predicated region
      $region79: #{gan_forward.3} parent=5 // pred_check
        %p828 = pneg %p827
      $region80: #{gan_forward.3} parent=5 // pred_check_branch
        %830 = sbr.rel (%p828) target = $region82
      $region81: #{gan_forward.3} parent=5 // pred_region
        %s831 = ssub.s32 %s9, 2
        // Predicated region
        $region83: #{gan_forward.3} parent=81 // pred_check
          %p832 = pneg %p106
        $region84: #{gan_forward.3} parent=81 // pred_check_branch
          %834 = sbr.rel (%p832) target = $region86
        $region85: #{gan_forward.3} parent=81 // pred_region
          %s835 = sand.u32 %s91, 1
          %s836 = sand.u32 %s91, 1
          %s837 = smul.addr %s836, 192
          %s838 = scalar_lea.vmem [#allocation3], %s837
        $region86: #{gan_forward.3} parent=81 // pred_fallthru
          _
      $region82: #{gan_forward.3} parent=5 // pred_fallthru
        _
    $region6: #{gan_forward.3} parent=1 // loop_footer
      %s13 = sadd.s32 1, %s9
    $region7: #{gan_forward.3} parent=1 // loop_footer_branch
      %8 = sbr.rel target = $region3
    $region8: #{gan_forward.3} parent=1 // loop_exit
      _

// kernel: squeeze.5
$region0: #{squeeze.5}
  %s0 = inlined_call_operand.vmem [shape: f32[1024], index: 0, kind: input, shape index: {}]
  %s1 = inlined_call_operand.vmem [shape: f32[4,1,16,16], index: 1, kind: output, shape index: {}]
  %v2 = vld [vmem:[%s0] sm:$0xff]
  %vm3 = vcmask 130048
  %4 = vst.msk [vmem:[%s1] ss:$8 sm:$0xf] %vm3, %v2
  %5 = vst.msk [vmem:[%s1] ss:$8 sm:$0xf0] %vm3, %v2
  %v6 = vld [vmem:[%s0] sm:$0xff]
  %7 = vrot.lane.b32.xlu0 %v6, 112
  %v8 = vpop.permute.xlu0 %7
  %vm9 = vcmask 130048
  %s10 = scalar_lea.vmem %s1, 1
  %11 = vst.msk [vmem:[%s10] ss:$8 sm:$0xf] %vm9, %v8
  %s12 = scalar_lea.vmem %s1, 1
  %13 = vst.msk [vmem:[%s12] ss:$8 sm:$0xf0] %vm9, %v8
  %v14 = vld [vmem:[%s0] sm:$0xff]
  %15 = vrot.lane.b32.xlu0 %v14, 96
  %v16 = vpop.permute.xlu0 %15
  %vm17 = vcmask 130048
  %s18 = scalar_lea.vmem %s1, 2
  %19 = vst.msk [vmem:[%s18] ss:$8 sm:$0xf] %vm17, %v16
  %s20 = scalar_lea.vmem %s1, 2
  %21 = vst.msk [vmem:[%s20] ss:$8 sm:$0xf0] %vm17, %v16
  %v22 = vld [vmem:[%s0] sm:$0xff]
  %23 = vrot.lane.b32.xlu0 %v22, 80
  %v24 = vpop.permute.xlu0 %23
  %vm25 = vcmask 130048
  %s26 = scalar_lea.vmem %s1, 3
  %27 = vst.msk [vmem:[%s26] ss:$8 sm:$0xf] %vm25, %v24
  %s28 = scalar_lea.vmem %s1, 3
  %29 = vst.msk [vmem:[%s28] ss:$8 sm:$0xf0] %vm25, %v24
  %v30 = vld [vmem:[%s0] sm:$0xff]
  %31 = vrot.lane.b32.xlu0 %v30, 64
  %v32 = vpop.permute.xlu0 %31
  %vm33 = vcmask 130048
  %s34 = scalar_lea.vmem %s1, 4
  %35 = vst.msk [vmem:[%s34] ss:$8 sm:$0xf] %vm33, %v32
  %s36 = scalar_lea.vmem %s1, 4
  %37 = vst.msk [vmem:[%s36] ss:$8 sm:$0xf0] %vm33, %v32
  %v38 = vld [vmem:[%s0] sm:$0xff]
  %39 = vrot.lane.b32.xlu0 %v38, 48
  %v40 = vpop.permute.xlu0 %39
  %vm41 = vcmask 130048
  %s42 = scalar_lea.vmem %s1, 5
  %43 = vst.msk [vmem:[%s42] ss:$8 sm:$0xf] %vm41, %v40
  %s44 = scalar_lea.vmem %s1, 5
  %45 = vst.msk [vmem:[%s44] ss:$8 sm:$0xf0] %vm41, %v40
  %v46 = vld [vmem:[%s0] sm:$0xff]
  %47 = vrot.lane.b32.xlu0 %v46, 32
  %v48 = vpop.permute.xlu0 %47
  %vm49 = vcmask 130048
  %s50 = scalar_lea.vmem %s1, 6
  %51 = vst.msk [vmem:[%s50] ss:$8 sm:$0xf] %vm49, %v48
  %s52 = scalar_lea.vmem %s1, 6
  %53 = vst.msk [vmem:[%s52] ss:$8 sm:$0xf0] %vm49, %v48
  %v54 = vld [vmem:[%s0] sm:$0xff]
  %55 = vrot.lane.b32.xlu0 %v54, 16
  %v56 = vpop.permute.xlu0 %55
  %vm57 = vcmask 130048
  %s58 = scalar_lea.vmem %s1, 7
  %59 = vst.msk [vmem:[%s58] ss:$8 sm:$0xf] %vm57, %v56
  %s60 = scalar_lea.vmem %s1, 7
  %61 = vst.msk [vmem:[%s60] ss:$8 sm:$0xf0] %vm57, %v56

// kernel: gan_forward.4
$region0: #{gan_forward.4}
  #allocation0 [shape = 'u32[]', space=smem, size = 0x4, offset = 0x4, fixed_abs, tag = 'smem constant byte address 0x4 - core index']
  #allocation1 [shape = 'u32[144,128]{1,0:T(1,128)}', space=vmem, size = 0x12000, scoped, tag = 'internal scratch']
  %s0 = inlined_call_operand.vmem [shape: bf16[48,1024], index: 0, kind: input, shape index: {}]
  %s1 = inlined_call_operand.vmem [shape: bf16[64,48], index: 1, kind: input, shape index: {}]
  %s2 = inlined_call_operand.vmem [shape: f32[64,1], index: 2, kind: input, shape index: {}]
  %s3 = inlined_call_operand.vmem [shape: bf16[8,64], index: 3, kind: input, shape index: {}]
  %s4 = inlined_call_operand.vmem [shape: f32[8,1], index: 4, kind: input, shape index: {}]
  %s5 = inlined_call_operand.vmem [shape: f32[8,1024], index: 5, kind: output, shape index: {}]
  %s6 = sld [smem:[#allocation0]]
  $region76: #{gan_forward.4} parent=0
    _
  %s8 = ssub.s32 1, %s6
  %s9 = scalar_select 0, %s8, %s6
  $region1: #{gan_forward.4} parent=0
    #allocation2 [shape = 'u8[98304]{0}', space=vmem, size = 0x18000, scoped, tag = 'input window, operand 0']
    loop: start=0, step=1, limit=4
    $region2: #{gan_forward.4} parent=1 // loop_pre_header
      _
    $region3: #{gan_forward.4} parent=1 // loop_header
      %s11 = sphi 0, %s15
      %p12 = scmp.ge.s32.totalorder %s11, 4
      %s21 = sphi 0, %s23
      %s24 = sphi 0, %s21
      %s25 = sphi 0, %s24
      %s41 = sphi 0, %s25
      %s45 = sphi 0, %s45
      %s47 = sphi 0, %s45
      %s48 = sphi 0, %s47
      %s62 = sphi 0, %s48
      %s66 = sphi 0, %s66
      %s68 = sphi 0, %s66
      %s69 = sphi 0, %s68
      %s83 = sphi 0, %s69
      %s87 = sphi 0, %s87
      %s89 = sphi 0, %s87
      %s90 = sphi 0, %s89
      %s104 = sphi 0, %s90
      %s108 = sphi 0, %s108
      %s110 = sphi 0, %s108
      %s111 = sphi 0, %s110
      %s125 = sphi 0, %s111
      %s131 = sphi 0, %s133
      %s134 = sphi 0, %s131
      %s135 = sphi 0, %s134
      %s151 = sphi 0, %s135
    $region4: #{gan_forward.4} parent=1 // loop_header_branch
      %14 = sbr.rel (%p12) target = $region8
    $region5: #{gan_forward.4} parent=1 // loop_body
      %s16 = ssub.s32 %s11, 1
      %s17 = ssub.s32 %s11, 2
      %s18 = sadd.s32 %s11, 1
      %s19 = ssub.s32 %s11, %s18
      %p20 = scmp.eq.s32.totalorder %s19, 0
      %s22 = sadd.s32 %s21, 1
      %s23 = scalar_select %p20, %s21, %s22
      %p26 = pneg %p20
      %p27 = scmp.eq.s32.totalorder %s11, 1
      %p28 = por %p26, %p27
      %p29 = scmp.ne.s32.totalorder %s21, %s24
      %p30 = scmp.eq.s32.totalorder %s11, 0
      %p31 = por %p29, %p30
      %p32 = scmp.ne.s32.totalorder %s21, %s24
      %p33 = scmp.eq.s32.totalorder %s16, 1
      %p34 = por %p32, %p33
      %p35 = scmp.ne.s32.totalorder %s24, %s25
      %p36 = scmp.eq.s32.totalorder %s16, 0
      %p37 = por %p35, %p36
      %p38 = scmp.ne.s32.totalorder %s24, %s25
      %p39 = scmp.eq.s32.totalorder %s17, 1
      %p40 = por %p38, %p39
      %p42 = scmp.ne.s32.totalorder %s25, %s41
      %p43 = scmp.eq.s32.totalorder %s17, 0
      %p44 = por %p42, %p43
      %s46 = sadd.s32 %s45, 1
      %p49 = scmp.eq.s32.totalorder %s11, 1
      %p50 = scmp.ne.s32.totalorder %s45, %s47
      %p51 = scmp.eq.s32.totalorder %s11, 0
      %p52 = por %p50, %p51
      %p53 = scmp.ne.s32.totalorder %s45, %s47
      %p54 = scmp.eq.s32.totalorder %s16, 1
      %p55 = por %p53, %p54
      %p56 = scmp.ne.s32.totalorder %s47, %s48
      %p57 = scmp.eq.s32.totalorder %s16, 0
      %p58 = por %p56, %p57
      %p59 = scmp.ne.s32.totalorder %s47, %s48
      %p60 = scmp.eq.s32.totalorder %s17, 1
      %p61 = por %p59, %p60
      %p63 = scmp.ne.s32.totalorder %s48, %s62
      %p64 = scmp.eq.s32.totalorder %s17, 0
      %p65 = por %p63, %p64
      %s67 = sadd.s32 %s66, 1
      %p70 = scmp.eq.s32.totalorder %s11, 1
      %p71 = scmp.ne.s32.totalorder %s66, %s68
      %p72 = scmp.eq.s32.totalorder %s11, 0
      %p73 = por %p71, %p72
      %p74 = scmp.ne.s32.totalorder %s66, %s68
      %p75 = scmp.eq.s32.totalorder %s16, 1
      %p76 = por %p74, %p75
      %p77 = scmp.ne.s32.totalorder %s68, %s69
      %p78 = scmp.eq.s32.totalorder %s16, 0
      %p79 = por %p77, %p78
      %p80 = scmp.ne.s32.totalorder %s68, %s69
      %p81 = scmp.eq.s32.totalorder %s17, 1
      %p82 = por %p80, %p81
      %p84 = scmp.ne.s32.totalorder %s69, %s83
      %p85 = scmp.eq.s32.totalorder %s17, 0
      %p86 = por %p84, %p85
      %s88 = sadd.s32 %s87, 1
      %p91 = scmp.eq.s32.totalorder %s11, 1
      %p92 = scmp.ne.s32.totalorder %s87, %s89
      %p93 = scmp.eq.s32.totalorder %s11, 0
      %p94 = por %p92, %p93
      %p95 = scmp.ne.s32.totalorder %s87, %s89
      %p96 = scmp.eq.s32.totalorder %s16, 1
      %p97 = por %p95, %p96
      %p98 = scmp.ne.s32.totalorder %s89, %s90
      %p99 = scmp.eq.s32.totalorder %s16, 0
      %p100 = por %p98, %p99
      %p101 = scmp.ne.s32.totalorder %s89, %s90
      %p102 = scmp.eq.s32.totalorder %s17, 1
      %p103 = por %p101, %p102
      %p105 = scmp.ne.s32.totalorder %s90, %s104
      %p106 = scmp.eq.s32.totalorder %s17, 0
      %p107 = por %p105, %p106
      %s109 = sadd.s32 %s108, 1
      %p112 = scmp.eq.s32.totalorder %s11, 1
      %p113 = scmp.ne.s32.totalorder %s108, %s110
      %p114 = scmp.eq.s32.totalorder %s11, 0
      %p115 = por %p113, %p114
      %p116 = scmp.ne.s32.totalorder %s108, %s110
      %p117 = scmp.eq.s32.totalorder %s16, 1
      %p118 = por %p116, %p117
      %p119 = scmp.ne.s32.totalorder %s110, %s111
      %p120 = scmp.eq.s32.totalorder %s16, 0
      %p121 = por %p119, %p120
      %p122 = scmp.ne.s32.totalorder %s110, %s111
      %p123 = scmp.eq.s32.totalorder %s17, 1
      %p124 = por %p122, %p123
      %p126 = scmp.ne.s32.totalorder %s111, %s125
      %p127 = scmp.eq.s32.totalorder %s17, 0
      %p128 = por %p126, %p127
      %s129 = ssub.s32 %s11, %s18
      %p130 = scmp.eq.s32.totalorder %s129, 0
      %s132 = sadd.s32 %s131, 1
      %s133 = scalar_select %p130, %s131, %s132
      %p136 = pneg %p130
      %p137 = scmp.eq.s32.totalorder %s11, 1
      %p138 = por %p136, %p137
      %p139 = scmp.ne.s32.totalorder %s131, %s134
      %p140 = scmp.eq.s32.totalorder %s11, 0
      %p141 = por %p139, %p140
      %p142 = scmp.ne.s32.totalorder %s131, %s134
      %p143 = scmp.eq.s32.totalorder %s16, 1
      %p144 = por %p142, %p143
      %p145 = scmp.ne.s32.totalorder %s134, %s135
      %p146 = scmp.eq.s32.totalorder %s16, 0
      %p147 = por %p145, %p146
      %p148 = scmp.ne.s32.totalorder %s134, %s135
      %p149 = scmp.eq.s32.totalorder %s17, 1
      %p150 = por %p148, %p149
      %p152 = scmp.ne.s32.totalorder %s135, %s151
      %p153 = scmp.eq.s32.totalorder %s17, 0
      %p154 = por %p152, %p153
      %p155 = scmp.le.s32.totalorder 1, %s11
      %p156 = scmp.lt.s32.totalorder %s11, 3
      %p157 = pnand %p155, %p156
      %p158 = pneg %p157
      // Predicated region
      $region9: #{gan_forward.4} parent=5 // pred_check
        _
      $region10: #{gan_forward.4} parent=5 // pred_check_branch
        %160 = sbr.rel (%p157) target = $region12
      $region11: #{gan_forward.4} parent=5 // pred_region
        %s161 = ssub.s32 %s11, 1
        // Predicated region
        $region13: #{gan_forward.4} parent=11 // pred_check
          %p162 = pneg %p58
        $region14: #{gan_forward.4} parent=11 // pred_check_branch
          %164 = sbr.rel (%p162) target = $region16
        $region15: #{gan_forward.4} parent=11 // pred_region
          _
        $region16: #{gan_forward.4} parent=11 // pred_fallthru
          _
        // Predicated region
        $region17: #{gan_forward.4} parent=11 // pred_check
          %p165 = pneg %p79
        $region18: #{gan_forward.4} parent=11 // pred_check_branch
          %167 = sbr.rel (%p165) target = $region20
        $region19: #{gan_forward.4} parent=11 // pred_region
          _
        $region20: #{gan_forward.4} parent=11 // pred_fallthru
          _
        // Predicated region
        $region21: #{gan_forward.4} parent=11 // pred_check
          %p168 = pneg %p100
        $region22: #{gan_forward.4} parent=11 // pred_check_branch
          %170 = sbr.rel (%p168) target = $region24
        $region23: #{gan_forward.4} parent=11 // pred_region
          _
        $region24: #{gan_forward.4} parent=11 // pred_fallthru
          _
        // Predicated region
        $region25: #{gan_forward.4} parent=11 // pred_check
          %p171 = pneg %p121
        $region26: #{gan_forward.4} parent=11 // pred_check_branch
          %173 = sbr.rel (%p171) target = $region28
        $region27: #{gan_forward.4} parent=11 // pred_region
          _
        $region28: #{gan_forward.4} parent=11 // pred_fallthru
          _
      $region12: #{gan_forward.4} parent=5 // pred_fallthru
        _
      %p174 = scmp.lt.s32.totalorder %s11, 2
      // Predicated region
      $region29: #{gan_forward.4} parent=5 // pred_check
        %p175 = pneg %p174
      $region30: #{gan_forward.4} parent=5 // pred_check_branch
        %177 = sbr.rel (%p175) target = $region32
      $region31: #{gan_forward.4} parent=5 // pred_region
        // Predicated region
        $region33: #{gan_forward.4} parent=31 // pred_check
          %p178 = pneg %p31
        $region34: #{gan_forward.4} parent=31 // pred_check_branch
          %180 = sbr.rel (%p178) target = $region36
        $region35: #{gan_forward.4} parent=31 // pred_region
          %s181 = sand.u32 %s21, 1
          %s182 = sand.u32 %s21, 1
          %s183 = smul.addr %s182, 96
          %s184 = scalar_lea.vmem [#allocation2], %s183
          %s185 = smul.u32 4, %s11
          %s186 = smul.addr %s185, 4
          %s187 = scalar_lea.vmem %s0, %s186
          // Predicated region
          $region37: #{gan_forward.4} parent=35 // pred_check
            _
          $region38: #{gan_forward.4} parent=35 // pred_check_branch
            %189 = sbr.rel (0) target = $region40
          $region39: #{gan_forward.4} parent=35 // pred_region
            // Predicated region
            $region41: #{gan_forward.4} parent=39 // pred_check
              _
            $region42: #{gan_forward.4} parent=39 // pred_check_branch
              %191 = sbr.rel (0) target = $region44
            $region43: #{gan_forward.4} parent=39 // pred_region
              loop: start=0, step=1, limit=1
              $region45: #{gan_forward.4} parent=43 // loop_pre_header
                _
              $region46: #{gan_forward.4} parent=43 // loop_header
                %s193 = sphi 0, %s197
                %p194 = scmp.ge.s32.totalorder %s193, 1
                %s198 = sphi %s187, %s187
                %s199 = sphi %s184, %s184
              $region47: #{gan_forward.4} parent=43 // loop_header_branch
                %196 = sbr.rel (%p194) target = $region51
              $region48: #{gan_forward.4} parent=43 // loop_body
                %v200 = vld [vmem:[%s198] sm:$0xff]
                %201 = vst [vmem:[%s199] sm:$0xff] %v200
                %v202 = vld [vmem:[%s198 + $0x8] sm:$0xff]
                %203 = vst [vmem:[%s199 + $0x8] sm:$0xff] %v202
                %v204 = vld [vmem:[%s198 + $0x20] sm:$0xff]
                %205 = vst [vmem:[%s199 + $0x10] sm:$0xff] %v204
                %v206 = vld [vmem:[%s198 + $0x28] sm:$0xff]
                %207 = vst [vmem:[%s199 + $0x18] sm:$0xff] %v206
                %v208 = vld [vmem:[%s198 + $0x40] sm:$0xff]
                %209 = vst [vmem:[%s199 + $0x20] sm:$0xff] %v208
                %v210 = vld [vmem:[%s198 + $0x48] sm:$0xff]
                %211 = vst [vmem:[%s199 + $0x28] sm:$0xff] %v210
                %v212 = vld [vmem:[%s198 + $0x60] sm:$0xff]
                %213 = vst [vmem:[%s199 + $0x30] sm:$0xff] %v212
                %v214 = vld [vmem:[%s198 + $0x68] sm:$0xff]
                %215 = vst [vmem:[%s199 + $0x38] sm:$0xff] %v214
                %v216 = vld [vmem:[%s198 + $0x80] sm:$0xff]
                %217 = vst [vmem:[%s199 + $0x40] sm:$0xff] %v216
                %v218 = vld [vmem:[%s198 + $0x88] sm:$0xff]
                %219 = vst [vmem:[%s199 + $0x48] sm:$0xff] %v218
                %v220 = vld [vmem:[%s198 + $0xa0] sm:$0xff]
                %221 = vst [vmem:[%s199 + $0x50] sm:$0xff] %v220
                %v222 = vld [vmem:[%s198 + $0xa8] sm:$0xff]
                %223 = vst [vmem:[%s199 + $0x58] sm:$0xff] %v222
              $region49: #{gan_forward.4} parent=43 // loop_footer
                %s197 = sadd.s32 1, %s193
              $region50: #{gan_forward.4} parent=43 // loop_footer_branch
                %192 = sbr.rel target = $region46
              $region51: #{gan_forward.4} parent=43 // loop_exit
                _
            $region44: #{gan_forward.4} parent=39 // pred_fallthru
              _
            // Predicated region
            $region52: #{gan_forward.4} parent=39 // pred_check
              _
            $region53: #{gan_forward.4} parent=39 // pred_check_branch
              %225 = sbr.rel target = $region55
            $region54: #{gan_forward.4} parent=39 // pred_region
              _
            $region55: #{gan_forward.4} parent=39 // pred_fallthru
              _
          $region40: #{gan_forward.4} parent=35 // pred_fallthru
            _
          %226 = vnop
        $region36: #{gan_forward.4} parent=31 // pred_fallthru
          _
      $region32: #{gan_forward.4} parent=5 // pred_fallthru
        _
      %p227 = scmp.le.s32.totalorder 1, %s11
      %p228 = scmp.lt.s32.totalorder %s11, 3
      %p229 = pnand %p227, %p228
      %p230 = pneg %p229
      // Predicated region
      $region56: #{gan_forward.4} parent=5 // pred_check
        _
      $region57: #{gan_forward.4} parent=5 // pred_check_branch
        %232 = sbr.rel (%p229) target = $region59
      $region58: #{gan_forward.4} parent=5 // pred_region
        %s233 = ssub.s32 %s11, 1
        %s234 = sand.u32 %s24, 1
        %s235 = sand.u32 %s24, 1
        %s236 = smul.addr %s235, 96
        %s237 = scalar_lea.vmem [#allocation2], %s236
        // Predicated region
        $region60: #{gan_forward.4} parent=58 // pred_check
          %p238 = pneg %p37
        $region61: #{gan_forward.4} parent=58 // pred_check_branch
          %240 = sbr.rel (%p238) target = $region63
        $region62: #{gan_forward.4} parent=58 // pred_region
          _
        $region63: #{gan_forward.4} parent=58 // pred_fallthru
          _
        %s241 = sand.u32 %s24, 1
        %s242 = sand.u32 %s24, 1
        %s243 = smul.addr %s242, 96
        %s244 = scalar_lea.vmem [#allocation2], %s243
        %p245 = pneg %p37
        %p246 = pneg %p34
        %p247 = pneg %p58
        %p248 = pneg %p55
        %p249 = pneg %p79
        %p250 = pneg %p76
        %p251 = pneg %p100
        %p252 = pneg %p97
        %p253 = pneg %p121
        %p254 = pneg %p118
        %p255 = pneg %p147
        %p256 = pneg %p144
        %s257 = smul.u32 4, %s16
        %p258 = scmp.lt.s32.totalorder %s257, 7
        %s259 = scalar_select %p258, %s257, 7
        %s260 = smul.addr %s259, 8
        %s261 = scalar_lea.vmem %s5, %s260
        %s262 = smul.u32 4, %s16
        %s263 = smul.u32 4, %s16
        %p264 = scmp.lt.s32.totalorder %s263, 7
        %s265 = scalar_select %p264, %s263, 7
        %s266 = smul.addr %s265, 8
        %s267 = scalar_lea.vmem %s5, %s266
        %s268 = smul.u32 4, %s16
        %v270 = vld [vmem:[%s1] sm:$0xf]
        %v271 = vld [vmem:[%s1 + $0x4] sm:$0xf]
        %v272 = vld [vmem:[%s1 + $0x8] sm:$0xf]
        %v273 = vld [vmem:[%s1 + $0xc] sm:$0xf]
        %v274 = vld [vmem:[%s1 + $0x10] sm:$0xf]
        %v275 = vld [vmem:[%s1 + $0x14] sm:$0xf]
        %v276 = vld [vmem:[%s1 + $0x18] sm:$0xf]
        %v277 = vld [vmem:[%s1 + $0x1c] sm:$0xf]
        %v278 = vld [vmem:[%s237] sm:$0xff]
        %v279 = vld [vmem:[%s237 + $0x8] sm:$0xff]
        %v280 = vld [vmem:[%s237 + $0x10] sm:$0xff]
        %v281 = vld [vmem:[%s237 + $0x18] sm:$0xff]
        %v282 = vld [vmem:[%s237 + $0x20] sm:$0xff]
        %v283 = vld [vmem:[%s237 + $0x28] sm:$0xff]
        %v284 = vld [vmem:[%s237 + $0x30] sm:$0xff]
        %v285 = vld [vmem:[%s237 + $0x38] sm:$0xff]
        %v286 = vld [vmem:[%s237 + $0x40] sm:$0xff]
        %v287 = vld [vmem:[%s237 + $0x48] sm:$0xff]
        %v288 = vld [vmem:[%s237 + $0x50] sm:$0xff]
        %v289 = vld [vmem:[%s237 + $0x58] sm:$0xff]
        %v290 = vld [vmem:[%s2] sm:$0xff]
        %v291 = vld [vmem:[%s2 + $0x8] sm:$0xff]
        %v292 = vld [vmem:[%s2 + $0x10] sm:$0xff]
        %v293 = vld [vmem:[%s2 + $0x18] sm:$0xff]
        %v294 = vld [vmem:[%s2 + $0x20] sm:$0xff]
        %v295 = vld [vmem:[%s2 + $0x28] sm:$0xff]
        %v296 = vld [vmem:[%s2 + $0x30] sm:$0xff]
        %v297 = vld [vmem:[%s2 + $0x38] sm:$0xff]
        %299 = vset.pattern.permute.xlu0 0
        %300 = vperm.xlu0 %299, %v290
        %v301 = vpop.permute.xlu0 %300
        %304 = vset.pattern.permute.xlu0 0
        %305 = vperm.xlu0 %304, %v291
        %v306 = vpop.permute.xlu0 %305
        %309 = vset.pattern.permute.xlu0 0
        %310 = vperm.xlu0 %309, %v292
        %v311 = vpop.permute.xlu0 %310
        %314 = vset.pattern.permute.xlu0 0
        %315 = vperm.xlu0 %314, %v293
        %v316 = vpop.permute.xlu0 %315
        %319 = vset.pattern.permute.xlu0 0
        %320 = vperm.xlu0 %319, %v294
        %v321 = vpop.permute.xlu0 %320
        %324 = vset.pattern.permute.xlu0 0
        %325 = vperm.xlu0 %324, %v295
        %v326 = vpop.permute.xlu0 %325
        %329 = vset.pattern.permute.xlu0 0
        %330 = vperm.xlu0 %329, %v296
        %v331 = vpop.permute.xlu0 %330
        %334 = vset.pattern.permute.xlu0 0
        %335 = vperm.xlu0 %334, %v297
        %v336 = vpop.permute.xlu0 %335
        %v346 = vunpack.c.l.b16 %v270
        %v347 = vunpack.c.l.b16 %v271
        %v348 = vunpack.c.l.b16 %v272
        %v349 = vunpack.c.l.b16 %v273
        %v350 = vunpack.c.l.b16 %v274
        %v351 = vunpack.c.l.b16 %v275
        %v352 = vunpack.c.l.b16 %v276
        %v353 = vunpack.c.l.b16 %v277
        %v354 = vpack.c.b16 %v347, %v346
        %v355 = vpack.c.b16 %v349, %v348
        %v356 = vpack.c.b16 %v351, %v350
        %v357 = vpack.c.b16 %v353, %v352
        %v370 = vunpack.c.l.b16 %v278
        %v371 = vunpack.c.h.b16 %v278
        %v372 = vunpack.c.l.b16 %v279
        %v373 = vunpack.c.h.b16 %v279
        %v374 = vunpack.c.l.b16 %v280
        %v375 = vunpack.c.h.b16 %v280
        %v376 = vunpack.c.l.b16 %v281
        %v377 = vunpack.c.h.b16 %v281
        %v378 = vunpack.c.l.b16 %v282
        %v379 = vunpack.c.h.b16 %v282
        %v380 = vunpack.c.l.b16 %v283
        %v381 = vunpack.c.h.b16 %v283
        %v382 = vunpack.c.l.b16 %v284
        %v383 = vunpack.c.h.b16 %v284
        %v384 = vunpack.c.l.b16 %v285
        %v385 = vunpack.c.h.b16 %v285
        %v386 = vunpack.c.l.b16 %v286
        %v387 = vunpack.c.h.b16 %v286
        %v388 = vunpack.c.l.b16 %v287
        %v389 = vunpack.c.h.b16 %v287
        %v390 = vunpack.c.l.b16 %v288
        %v391 = vunpack.c.h.b16 %v288
        %v392 = vunpack.c.l.b16 %v289
        %v393 = vunpack.c.h.b16 %v289
        %v394 = vpack.c.b16 %v374, %v370
        %v395 = vpack.c.b16 %v375, %v371
        %v396 = vpack.c.b16 %v376, %v372
        %v397 = vpack.c.b16 %v377, %v373
        %v398 = vpack.c.b16 %v382, %v378
        %v399 = vpack.c.b16 %v383, %v379
        %v400 = vpack.c.b16 %v384, %v380
        %v401 = vpack.c.b16 %v385, %v381
        %v402 = vpack.c.b16 %v390, %v386
        %v403 = vpack.c.b16 %v391, %v387
        %v404 = vpack.c.b16 %v392, %v388
        %v405 = vpack.c.b16 %v393, %v389
        %vm418 = vcmask 392192
        %v420 = vsel %vm418, %v354, 0
        %v423 = vsel %vm418, %v355, 0
        %v426 = vsel %vm418, %v356, 0
        %v429 = vsel %vm418, %v357, 0
        %431 = vmatprep.subr.bf16.mxu0 0
        %432 = vmatpush1.bf16.msra.mxu0 0
        %433 = vmatprep.subr.bf16.mxu0 0
        %434 = vmatpush1.bf16.msra.mxu0 0
        %435 = vmatprep.subr.bf16.mxu0 0
        %436 = vmatpush1.bf16.msra.mxu0 0
        %437 = vmatprep.subr.bf16.mxu0 0
        %438 = vmatpush1.bf16.msra.mxu0 0
        %439 = vmatprep.subr.bf16.mxu0 0
        %440 = vmatpush1.bf16.msra.mxu0 0
        %441 = vmatprep.subr.bf16.mxu0 %v403
        %442 = vmatpush1.bf16.msra.mxu0 %v402
        %443 = vmatprep.subr.bf16.mxu0 %v399
        %444 = vmatpush1.bf16.msra.mxu0 %v398
        %445 = vmatprep.subr.bf16.mxu0 %v395
        %446 = vmatpush1.bf16.msra.mxu0 %v394
        %447 = vmatprep.subr.bf16.mxu0 0
        %448 = vmatpush2.bf16.msra.mxu0 0
        %449 = vmatprep.subr.bf16.mxu0 0
        %450 = vmatpush2.bf16.msra.mxu0 0
        %451 = vmatprep.subr.bf16.mxu0 0
        %452 = vmatpush2.bf16.msra.mxu0 0
        %453 = vmatprep.subr.bf16.mxu0 0
        %454 = vmatpush2.bf16.msra.mxu0 0
        %455 = vmatprep.subr.bf16.mxu0 0
        %456 = vmatpush2.bf16.msra.mxu0 0
        %457 = vmatprep.subr.bf16.mxu0 0
        %458 = vmatpush2.bf16.msra.mxu0 0
        %459 = vmatprep.subr.bf16.mxu0 0
        %460 = vmatpush2.bf16.msra.mxu0 0
        %461 = vmatprep.subr.bf16.mxu0 0
        %462 = vmatpush2.bf16.msra.mxu0 0
        %463 = vmatprep.mubr.bf16.mxu0 0
        %464 = vmatmul.mubr.bf16.gmra.mxu0 %v420
        %v465 = vpop.f32.mrf.mxu0
        %v466 = vadd.f32 %v301, %v465
        %v467 = vpop.f32.mrf.mxu0
        %v468 = vadd.f32 %v301, %v467
        %v469 = vpop.f32.mrf.mxu0
        %v470 = vadd.f32 %v306, %v469
        %v471 = vpop.f32.mrf.mxu0
        %v472 = vadd.f32 %v306, %v471
        %473 = vmatprep.mubr.bf16.mxu0 0
        %474 = vmatmul.mubr.bf16.gmra.mxu0 %v423
        %v475 = vpop.f32.mrf.mxu0
        %v476 = vadd.f32 %v311, %v475
        %v477 = vpop.f32.mrf.mxu0
        %v478 = vadd.f32 %v311, %v477
        %v479 = vpop.f32.mrf.mxu0
        %v480 = vadd.f32 %v316, %v479
        %v481 = vpop.f32.mrf.mxu0
        %v482 = vadd.f32 %v316, %v481
        %483 = vmatprep.mubr.bf16.mxu0 0
        %484 = vmatmul.mubr.bf16.gmra.mxu0 %v426
        %v485 = vpop.f32.mrf.mxu0
        %v486 = vadd.f32 %v321, %v485
        %v487 = vpop.f32.mrf.mxu0
        %v488 = vadd.f32 %v321, %v487
        %v489 = vpop.f32.mrf.mxu0
        %v490 = vadd.f32 %v326, %v489
        %v491 = vpop.f32.mrf.mxu0
        %v492 = vadd.f32 %v326, %v491
        %493 = vmatprep.mubr.bf16.mxu0 0
        %494 = vmatmul.mubr.bf16.gmra.mxu0 %v429
        %v495 = vpop.f32.mrf.mxu0
        %v496 = vadd.f32 %v331, %v495
        %v497 = vpop.f32.mrf.mxu0
        %v498 = vadd.f32 %v331, %v497
        %v499 = vpop.f32.mrf.mxu0
        %v500 = vadd.f32 %v336, %v499
        %v501 = vpop.f32.mrf.mxu0
        %v502 = vadd.f32 %v336, %v501
        %503 = vdwg.mxu0
        %504 = vmatprep.subr.bf16.mxu0 0
        %505 = vmatpush1.bf16.msra.mxu0 0
        %506 = vmatprep.subr.bf16.mxu0 0
        %507 = vmatpush1.bf16.msra.mxu0 0
        %508 = vmatprep.subr.bf16.mxu0 0
        %509 = vmatpush1.bf16.msra.mxu0 0
        %510 = vmatprep.subr.bf16.mxu0 0
        %511 = vmatpush1.bf16.msra.mxu0 0
        %512 = vmatprep.subr.bf16.mxu0 0
        %513 = vmatpush1.bf16.msra.mxu0 0
        %514 = vmatprep.subr.bf16.mxu0 %v405
        %515 = vmatpush1.bf16.msra.mxu0 %v404
        %516 = vmatprep.subr.bf16.mxu0 %v401
        %517 = vmatpush1.bf16.msra.mxu0 %v400
        %518 = vmatprep.subr.bf16.mxu0 %v397
        %519 = vmatpush1.bf16.msra.mxu0 %v396
        %520 = vmatprep.subr.bf16.mxu0 0
        %521 = vmatpush2.bf16.msra.mxu0 0
        %522 = vmatprep.subr.bf16.mxu0 0
        %523 = vmatpush2.bf16.msra.mxu0 0
        %524 = vmatprep.subr.bf16.mxu0 0
        %525 = vmatpush2.bf16.msra.mxu0 0
        %526 = vmatprep.subr.bf16.mxu0 0
        %527 = vmatpush2.bf16.msra.mxu0 0
        %528 = vmatprep.subr.bf16.mxu0 0
        %529 = vmatpush2.bf16.msra.mxu0 0
        %530 = vmatprep.subr.bf16.mxu0 0
        %531 = vmatpush2.bf16.msra.mxu0 0
        %532 = vmatprep.subr.bf16.mxu0 0
        %533 = vmatpush2.bf16.msra.mxu0 0
        %534 = vmatprep.subr.bf16.mxu0 0
        %535 = vmatpush2.bf16.msra.mxu0 0
        %536 = vmatprep.mubr.bf16.mxu0 0
        %537 = vmatmul.mubr.bf16.gmra.mxu0 %v420
        %v538 = vpop.f32.mrf.mxu0
        %v539 = vadd.f32 %v301, %v538
        %v540 = vpop.f32.mrf.mxu0
        %v541 = vadd.f32 %v301, %v540
        %v542 = vpop.f32.mrf.mxu0
        %v543 = vadd.f32 %v306, %v542
        %v544 = vpop.f32.mrf.mxu0
        %v545 = vadd.f32 %v306, %v544
        %546 = vmatprep.mubr.bf16.mxu0 0
        %547 = vmatmul.mubr.bf16.gmra.mxu0 %v423
        %v548 = vpop.f32.mrf.mxu0
        %v549 = vadd.f32 %v311, %v548
        %v550 = vpop.f32.mrf.mxu0
        %v551 = vadd.f32 %v311, %v550
        %v552 = vpop.f32.mrf.mxu0
        %v553 = vadd.f32 %v316, %v552
        %v554 = vpop.f32.mrf.mxu0
        %v555 = vadd.f32 %v316, %v554
        %556 = vmatprep.mubr.bf16.mxu0 0
        %557 = vmatmul.mubr.bf16.gmra.mxu0 %v426
        %v558 = vpop.f32.mrf.mxu0
        %v559 = vadd.f32 %v321, %v558
        %v560 = vpop.f32.mrf.mxu0
        %v561 = vadd.f32 %v321, %v560
        %v562 = vpop.f32.mrf.mxu0
        %v563 = vadd.f32 %v326, %v562
        %v564 = vpop.f32.mrf.mxu0
        %v565 = vadd.f32 %v326, %v564
        %566 = vmatprep.mubr.bf16.mxu0 0
        %567 = vmatmul.mubr.bf16.gmra.mxu0 %v429
        %v568 = vpop.f32.mrf.mxu0
        %v569 = vadd.f32 %v331, %v568
        %v570 = vpop.f32.mrf.mxu0
        %v571 = vadd.f32 %v331, %v570
        %v572 = vpop.f32.mrf.mxu0
        %v573 = vadd.f32 %v336, %v572
        %v574 = vpop.f32.mrf.mxu0
        %v575 = vadd.f32 %v336, %v574
        %576 = vdwg.mxu0
        %vm577 = vcmp.gt.f32.partialorder %v466, 0.0
        %vm578 = vcmp.gt.f32.partialorder %v468, 0.0
        %vm579 = vcmp.gt.f32.partialorder %v539, 0.0
        %vm580 = vcmp.gt.f32.partialorder %v541, 0.0
        %vm581 = vcmp.gt.f32.partialorder %v470, 0.0
        %vm582 = vcmp.gt.f32.partialorder %v472, 0.0
        %vm583 = vcmp.gt.f32.partialorder %v543, 0.0
        %vm584 = vcmp.gt.f32.partialorder %v545, 0.0
        %vm585 = vcmp.gt.f32.partialorder %v476, 0.0
        %vm586 = vcmp.gt.f32.partialorder %v478, 0.0
        %vm587 = vcmp.gt.f32.partialorder %v549, 0.0
        %vm588 = vcmp.gt.f32.partialorder %v551, 0.0
        %vm589 = vcmp.gt.f32.partialorder %v480, 0.0
        %vm590 = vcmp.gt.f32.partialorder %v482, 0.0
        %vm591 = vcmp.gt.f32.partialorder %v553, 0.0
        %vm592 = vcmp.gt.f32.partialorder %v555, 0.0
        %vm593 = vcmp.gt.f32.partialorder %v486, 0.0
        %vm594 = vcmp.gt.f32.partialorder %v488, 0.0
        %vm595 = vcmp.gt.f32.partialorder %v559, 0.0
        %vm596 = vcmp.gt.f32.partialorder %v561, 0.0
        %vm597 = vcmp.gt.f32.partialorder %v490, 0.0
        %vm598 = vcmp.gt.f32.partialorder %v492, 0.0
        %vm599 = vcmp.gt.f32.partialorder %v563, 0.0
        %vm600 = vcmp.gt.f32.partialorder %v565, 0.0
        %vm601 = vcmp.gt.f32.partialorder %v496, 0.0
        %vm602 = vcmp.gt.f32.partialorder %v498, 0.0
        %vm603 = vcmp.gt.f32.partialorder %v569, 0.0
        %vm604 = vcmp.gt.f32.partialorder %v571, 0.0
        %vm605 = vcmp.gt.f32.partialorder %v500, 0.0
        %vm606 = vcmp.gt.f32.partialorder %v502, 0.0
        %vm607 = vcmp.gt.f32.partialorder %v573, 0.0
        %vm608 = vcmp.gt.f32.partialorder %v575, 0.0
        %v609 = vmul.f32 %v466, 0.2
        %v610 = vmul.f32 %v468, 0.2
        %v611 = vmul.f32 %v539, 0.2
        %v612 = vmul.f32 %v541, 0.2
        %v613 = vmul.f32 %v470, 0.2
        %v614 = vmul.f32 %v472, 0.2
        %v615 = vmul.f32 %v543, 0.2
        %v616 = vmul.f32 %v545, 0.2
        %v617 = vmul.f32 %v476, 0.2
        %v618 = vmul.f32 %v478, 0.2
        %v619 = vmul.f32 %v549, 0.2
        %v620 = vmul.f32 %v551, 0.2
        %v621 = vmul.f32 %v480, 0.2
        %v622 = vmul.f32 %v482, 0.2
        %v623 = vmul.f32 %v553, 0.2
        %v624 = vmul.f32 %v555, 0.2
        %v625 = vmul.f32 %v486, 0.2
        %v626 = vmul.f32 %v488, 0.2
        %v627 = vmul.f32 %v559, 0.2
        %v628 = vmul.f32 %v561, 0.2
        %v629 = vmul.f32 %v490, 0.2
        %v630 = vmul.f32 %v492, 0.2
        %v631 = vmul.f32 %v563, 0.2
        %v632 = vmul.f32 %v565, 0.2
        %v633 = vmul.f32 %v496, 0.2
        %v634 = vmul.f32 %v498, 0.2
        %v635 = vmul.f32 %v569, 0.2
        %v636 = vmul.f32 %v571, 0.2
        %v637 = vmul.f32 %v500, 0.2
        %v638 = vmul.f32 %v502, 0.2
        %v639 = vmul.f32 %v573, 0.2
        %v640 = vmul.f32 %v575, 0.2
        %v641 = vsel %vm577, %v466, %v609
        %v642 = vsel %vm578, %v468, %v610
        %v643 = vsel %vm579, %v539, %v611
        %v644 = vsel %vm580, %v541, %v612
        %v645 = vsel %vm581, %v470, %v613
        %v646 = vsel %vm582, %v472, %v614
        %v647 = vsel %vm583, %v543, %v615
        %v648 = vsel %vm584, %v545, %v616
        %v649 = vsel %vm585, %v476, %v617
        %v650 = vsel %vm586, %v478, %v618
        %v651 = vsel %vm587, %v549, %v619
        %v652 = vsel %vm588, %v551, %v620
        %v653 = vsel %vm589, %v480, %v621
        %v654 = vsel %vm590, %v482, %v622
        %v655 = vsel %vm591, %v553, %v623
        %v656 = vsel %vm592, %v555, %v624
        %v657 = vsel %vm593, %v486, %v625
        %v658 = vsel %vm594, %v488, %v626
        %v659 = vsel %vm595, %v559, %v627
        %v660 = vsel %vm596, %v561, %v628
        %v661 = vsel %vm597, %v490, %v629
        %v662 = vsel %vm598, %v492, %v630
        %v663 = vsel %vm599, %v563, %v631
        %v664 = vsel %vm600, %v565, %v632
        %v665 = vsel %vm601, %v496, %v633
        %v666 = vsel %vm602, %v498, %v634
        %v667 = vsel %vm603, %v569, %v635
        %v668 = vsel %vm604, %v571, %v636
        %v669 = vsel %vm605, %v500, %v637
        %v670 = vsel %vm606, %v502, %v638
        %v671 = vsel %vm607, %v573, %v639
        %v672 = vsel %vm608, %v575, %v640
        %v673 = vld [vmem:[%s3] sm:$0xf]
        %v674 = vpack.c.bf16 %v645, %v641
        %v675 = vpack.c.bf16 %v646, %v642
        %v676 = vpack.c.bf16 %v647, %v643
        %v677 = vpack.c.bf16 %v648, %v644
        %v678 = vpack.c.bf16 %v653, %v649
        %v679 = vpack.c.bf16 %v654, %v650
        %v680 = vpack.c.bf16 %v655, %v651
        %v681 = vpack.c.bf16 %v656, %v652
        %v682 = vpack.c.bf16 %v661, %v657
        %v683 = vpack.c.bf16 %v662, %v658
        %v684 = vpack.c.bf16 %v663, %v659
        %v685 = vpack.c.bf16 %v664, %v660
        %v686 = vpack.c.bf16 %v669, %v665
        %v687 = vpack.c.bf16 %v670, %v666
        %v688 = vpack.c.bf16 %v671, %v667
        %v689 = vpack.c.bf16 %v672, %v668
        %v690 = vld [vmem:[%s4] sm:$0xff]
        %692 = vset.pattern.permute.xlu0 0
        %693 = vperm.xlu0 %692, %v690
        %v694 = vpop.permute.xlu0 %693
        %vm696 = vcmask 523264
        %v698 = vsel %vm696, %v673, 0
        %700 = vmatprep.subr.bf16.mxu0 0
        %701 = vmatpush1.bf16.msra.mxu0 0
        %702 = vmatprep.subr.bf16.mxu0 0
        %703 = vmatpush1.bf16.msra.mxu0 0
        %704 = vmatprep.subr.bf16.mxu0 0
        %705 = vmatpush1.bf16.msra.mxu0 0
        %706 = vmatprep.subr.bf16.mxu0 0
        %707 = vmatpush1.bf16.msra.mxu0 0
        %708 = vmatprep.subr.bf16.mxu0 %v687
        %709 = vmatpush1.bf16.msra.mxu0 %v686
        %710 = vmatprep.subr.bf16.mxu0 %v683
        %711 = vmatpush1.bf16.msra.mxu0 %v682
        %712 = vmatprep.subr.bf16.mxu0 %v679
        %713 = vmatpush1.bf16.msra.mxu0 %v678
        %714 = vmatprep.subr.bf16.mxu0 %v675
        %715 = vmatpush1.bf16.msra.mxu0 %v674
        %716 = vmatprep.subr.bf16.mxu0 0
        %717 = vmatpush2.bf16.msra.mxu0 0
        %718 = vmatprep.subr.bf16.mxu0 0
        %719 = vmatpush2.bf16.msra.mxu0 0
        %720 = vmatprep.subr.bf16.mxu0 0
        %721 = vmatpush2.bf16.msra.mxu0 0
        %722 = vmatprep.subr.bf16.mxu0 0
        %723 = vmatpush2.bf16.msra.mxu0 0
        %724 = vmatprep.subr.bf16.mxu0 0
        %725 = vmatpush2.bf16.msra.mxu0 0
        %726 = vmatprep.subr.bf16.mxu0 0
        %727 = vmatpush2.bf16.msra.mxu0 0
        %728 = vmatprep.subr.bf16.mxu0 0
        %729 = vmatpush2.bf16.msra.mxu0 0
        %730 = vmatprep.subr.bf16.mxu0 0
        %731 = vmatpush2.bf16.msra.mxu0 0
        %732 = vmatprep.mubr.bf16.mxu0 0
        %733 = vmatmul.mubr.bf16.gmra.mxu0 %v698
        %v734 = vpop.f32.mrf.mxu0
        %v735 = vadd.f32 %v694, %v734
        %v736 = vpop.f32.mrf.mxu0
        %v737 = vadd.f32 %v694, %v736
        %v738 = vpop.f32.mrf.mxu0
        %v739 = vpop.f32.mrf.mxu0
        %740 = vdwg.mxu0
        %741 = vmatprep.subr.bf16.mxu0 0
        %742 = vmatpush1.bf16.msra.mxu0 0
        %743 = vmatprep.subr.bf16.mxu0 0
        %744 = vmatpush1.bf16.msra.mxu0 0
        %745 = vmatprep.subr.bf16.mxu0 0
        %746 = vmatpush1.bf16.msra.mxu0 0
        %747 = vmatprep.subr.bf16.mxu0 0
        %748 = vmatpush1.bf16.msra.mxu0 0
        %749 = vmatprep.subr.bf16.mxu0 %v689
        %750 = vmatpush1.bf16.msra.mxu0 %v688
        %751 = vmatprep.subr.bf16.mxu0 %v685
        %752 = vmatpush1.bf16.msra.mxu0 %v684
        %753 = vmatprep.subr.bf16.mxu0 %v681
        %754 = vmatpush1.bf16.msra.mxu0 %v680
        %755 = vmatprep.subr.bf16.mxu0 %v677
        %756 = vmatpush1.bf16.msra.mxu0 %v676
        %757 = vmatprep.subr.bf16.mxu0 0
        %758 = vmatpush2.bf16.msra.mxu0 0
        %759 = vmatprep.subr.bf16.mxu0 0
        %760 = vmatpush2.bf16.msra.mxu0 0
        %761 = vmatprep.subr.bf16.mxu0 0
        %762 = vmatpush2.bf16.msra.mxu0 0
        %763 = vmatprep.subr.bf16.mxu0 0
        %764 = vmatpush2.bf16.msra.mxu0 0
        %765 = vmatprep.subr.bf16.mxu0 0
        %766 = vmatpush2.bf16.msra.mxu0 0
        %767 = vmatprep.subr.bf16.mxu0 0
        %768 = vmatpush2.bf16.msra.mxu0 0
        %769 = vmatprep.subr.bf16.mxu0 0
        %770 = vmatpush2.bf16.msra.mxu0 0
        %771 = vmatprep.subr.bf16.mxu0 0
        %772 = vmatpush2.bf16.msra.mxu0 0
        %773 = vmatprep.mubr.bf16.mxu0 0
        %774 = vmatmul.mubr.bf16.gmra.mxu0 %v698
        %v775 = vpop.f32.mrf.mxu0
        %v776 = vadd.f32 %v694, %v775
        %v777 = vpop.f32.mrf.mxu0
        %v778 = vadd.f32 %v694, %v777
        %v779 = vpop.f32.mrf.mxu0
        %v780 = vpop.f32.mrf.mxu0
        %781 = vdwg.mxu0
        %v782 = vxor.u32 %v735, 2147483648
        %v783 = vxor.u32 %v737, 2147483648
        %v784 = vxor.u32 %v776, 2147483648
        %v785 = vxor.u32 %v778, 2147483648
        %v786 = vmul.f32 %v782, 1.442695
        %v787 = vpow.pop %v786
        %v788 = vmul.f32 %v783, 1.442695
        %v789 = vpow.pop %v788
        %v790 = vmul.f32 %v784, 1.442695
        %v791 = vpow.pop %v790
        %v792 = vmul.f32 %v785, 1.442695
        %v793 = vpow.pop %v792
        %v794 = vadd.f32 %v787, 1.0
        %v795 = vadd.f32 %v789, 1.0
        %v796 = vadd.f32 %v791, 1.0
        %v797 = vadd.f32 %v793, 1.0
        %v798 = vrcp.pop %v794
        %v799 = vmul.f32 1.0, %v798
        %v800 = vrcp.pop %v795
        %v801 = vmul.f32 1.0, %v800
        %v802 = vrcp.pop %v796
        %v803 = vmul.f32 1.0, %v802
        %v804 = vrcp.pop %v797
        %v805 = vmul.f32 1.0, %v804
        %806 = vst [vmem:[%s267] sm:$0xff] %v799
        %807 = vst [vmem:[%s267 + $0x8] sm:$0xff] %v801
        %808 = vst [vmem:[%s267 + $0x10] sm:$0xff] %v803
        %809 = vst [vmem:[%s267 + $0x18] sm:$0xff] %v805
        %s810 = smul.u32 4, %s16
        %p811 = scmp.lt.s32.totalorder %s810, 7
        %s812 = scalar_select %p811, %s810, 7
        %s813 = smul.addr %s812, 8
        %s814 = scalar_lea.vmem %s5, %s813
        // Predicated region
        $region64: #{gan_forward.4} parent=58 // pred_check
          %p815 = pneg %p144
        $region65: #{gan_forward.4} parent=58 // pred_check_branch
          %817 = sbr.rel (%p815) target = $region67
        $region66: #{gan_forward.4} parent=58 // pred_region
          %s818 = smul.u32 4, %s16
        $region67: #{gan_forward.4} parent=58 // pred_fallthru
          _
      $region59: #{gan_forward.4} parent=5 // pred_fallthru
        _
      %p819 = scmp.le.s32.totalorder 2, %s11
      // Predicated region
      $region68: #{gan_forward.4} parent=5 // pred_check
        %p820 = pneg %p819
      $region69: #{gan_forward.4} parent=5 // pred_check_branch
        %822 = sbr.rel (%p820) target = $region71
      $region70: #{gan_forward.4} parent=5 // pred_region
        %s823 = ssub.s32 %s11, 2
        // Predicated region
        $region72: #{gan_forward.4} parent=70 // pred_check
          %p824 = pneg %p150
        $region73: #{gan_forward.4} parent=70 // pred_check_branch
          %826 = sbr.rel (%p824) target = $region75
        $region74: #{gan_forward.4} parent=70 // pred_region
          %s827 = smul.u32 4, %s17
          %p828 = scmp.lt.s32.totalorder %s827, 7
          %s829 = scalar_select %p828, %s827, 7
          %s830 = smul.addr %s829, 8
          %s831 = scalar_lea.vmem %s5, %s830
        $region75: #{gan_forward.4} parent=70 // pred_fallthru
          _
      $region71: #{gan_forward.4} parent=5 // pred_fallthru
        _
    $region6: #{gan_forward.4} parent=1 // loop_footer
      %s15 = sadd.s32 1, %s11
    $region7: #{gan_forward.4} parent=1 // loop_footer_branch
      %10 = sbr.rel target = $region3
    $region8: #{gan_forward.4} parent=1 // loop_exit
      _

// kernel: gan_forward.5
$region0: #{gan_forward.5}
  #allocation0 [shape = 'u32[]', space=smem, size = 0x4, offset = 0x4, fixed_abs, tag = 'smem constant byte address 0x4 - core index']
  #allocation1 [shape = 'u32[144,128]{1,0:T(1,128)}', space=vmem, size = 0x12000, scoped, tag = 'internal scratch']
  %s0 = inlined_call_operand.vmem [shape: f32[2,3,32,32], index: 0, kind: input, shape index: {}]
  %s1 = inlined_call_operand.vmem [shape: f32[2,3,32,32], index: 1, kind: input, shape index: {}]
  %s2 = inlined_call_operand.vmem [shape: f32[8,32], index: 2, kind: input, shape index: {}]
  %s3 = inlined_call_operand.vmem [shape: f32[32,8], index: 3, kind: input, shape index: {}]
  %s4 = inlined_call_operand.vmem [shape: f32[8,8], index: 4, kind: input, shape index: {}]
  %s5 = inlined_call_operand.hbm [shape: f32[2,1,8,8], index: 5, kind: output, shape index: {}]
  %s6 = sld [smem:[#allocation0]]
  $region53: #{gan_forward.5} parent=0
    _
  %s8 = ssub.s32 1, %s6
  %s9 = scalar_select 0, %s8, %s6
  $region1: #{gan_forward.5} parent=0
    #allocation2 [shape = 'u8[8192]{0}', space=vmem, size = 0x2000, scoped, tag = 'output window, operand 0']
    #allocation3 [shape = 's32[2]{0}', space=sflag, size = 0x8, scoped, tag = 'scoped memory for gan_forward.5']
    %10 = vsyncpa [#allocation3], 0
    %s11 = scalar_lea.sflag [#allocation3], 1
    %12 = vsyncpa %s11, 0
    loop: start=0, step=1, limit=4
    $region2: #{gan_forward.5} parent=1 // loop_pre_header
      _
    $region3: #{gan_forward.5} parent=1 // loop_header
      %s14 = sphi 0, %s18
      %p15 = scmp.ge.s32.totalorder %s14, 4
      %s24 = sphi 0, %s26
      %s27 = sphi 0, %s24
      %s28 = sphi 0, %s27
      %s44 = sphi 0, %s28
      %s50 = sphi 0, %s52
      %s53 = sphi 0, %s50
      %s54 = sphi 0, %s53
      %s70 = sphi 0, %s54
      %s74 = sphi 0, %s74
      %s76 = sphi 0, %s74
      %s77 = sphi 0, %s76
      %s91 = sphi 0, %s77
      %s95 = sphi 0, %s95
      %s97 = sphi 0, %s95
      %s98 = sphi 0, %s97
      %s112 = sphi 0, %s98
      %s116 = sphi 0, %s116
      %s118 = sphi 0, %s116
      %s119 = sphi 0, %s118
      %s133 = sphi 0, %s119
      %s139 = sphi 0, %s141
      %s142 = sphi 0, %s139
      %s143 = sphi 0, %s142
      %s159 = sphi 0, %s143
    $region4: #{gan_forward.5} parent=1 // loop_header_branch
      %17 = sbr.rel (%p15) target = $region8
    $region5: #{gan_forward.5} parent=1 // loop_body
      %s19 = ssub.s32 %s14, 1
      %s20 = ssub.s32 %s14, 2
      %s21 = sadd.s32 %s14, 1
      %s22 = ssub.s32 %s14, %s21
      %p23 = scmp.eq.s32.totalorder %s22, 0
      %s25 = sadd.s32 %s24, 1
      %s26 = scalar_select %p23, %s24, %s25
      %p29 = pneg %p23
      %p30 = scmp.eq.s32.totalorder %s14, 1
      %p31 = por %p29, %p30
      %p32 = scmp.ne.s32.totalorder %s24, %s27
      %p33 = scmp.eq.s32.totalorder %s14, 0
      %p34 = por %p32, %p33
      %p35 = scmp.ne.s32.totalorder %s24, %s27
      %p36 = scmp.eq.s32.totalorder %s19, 1
      %p37 = por %p35, %p36
      %p38 = scmp.ne.s32.totalorder %s27, %s28
      %p39 = scmp.eq.s32.totalorder %s19, 0
      %p40 = por %p38, %p39
      %p41 = scmp.ne.s32.totalorder %s27, %s28
      %p42 = scmp.eq.s32.totalorder %s20, 1
      %p43 = por %p41, %p42
      %p45 = scmp.ne.s32.totalorder %s28, %s44
      %p46 = scmp.eq.s32.totalorder %s20, 0
      %p47 = por %p45, %p46
      %s48 = ssub.s32 %s14, %s21
      %p49 = scmp.eq.s32.totalorder %s48, 0
      %s51 = sadd.s32 %s50, 1
      %s52 = scalar_select %p49, %s50, %s51
      %p55 = pneg %p49
      %p56 = scmp.eq.s32.totalorder %s14, 1
      %p57 = por %p55, %p56
      %p58 = scmp.ne.s32.totalorder %s50, %s53
      %p59 = scmp.eq.s32.totalorder %s14, 0
      %p60 = por %p58, %p59
      %p61 = scmp.ne.s32.totalorder %s50, %s53
      %p62 = scmp.eq.s32.totalorder %s19, 1
      %p63 = por %p61, %p62
      %p64 = scmp.ne.s32.totalorder %s53, %s54
      %p65 = scmp.eq.s32.totalorder %s19, 0
      %p66 = por %p64, %p65
      %p67 = scmp.ne.s32.totalorder %s53, %s54
      %p68 = scmp.eq.s32.totalorder %s20, 1
      %p69 = por %p67, %p68
      %p71 = scmp.ne.s32.totalorder %s54, %s70
      %p72 = scmp.eq.s32.totalorder %s20, 0
      %p73 = por %p71, %p72
      %s75 = sadd.s32 %s74, 1
      %p78 = scmp.eq.s32.totalorder %s14, 1
      %p79 = scmp.ne.s32.totalorder %s74, %s76
      %p80 = scmp.eq.s32.totalorder %s14, 0
      %p81 = por %p79, %p80
      %p82 = scmp.ne.s32.totalorder %s74, %s76
      %p83 = scmp.eq.s32.totalorder %s19, 1
      %p84 = por %p82, %p83
      %p85 = scmp.ne.s32.totalorder %s76, %s77
      %p86 = scmp.eq.s32.totalorder %s19, 0
      %p87 = por %p85, %p86
      %p88 = scmp.ne.s32.totalorder %s76, %s77
      %p89 = scmp.eq.s32.totalorder %s20, 1
      %p90 = por %p88, %p89
      %p92 = scmp.ne.s32.totalorder %s77, %s91
      %p93 = scmp.eq.s32.totalorder %s20, 0
      %p94 = por %p92, %p93
      %s96 = sadd.s32 %s95, 1
      %p99 = scmp.eq.s32.totalorder %s14, 1
      %p100 = scmp.ne.s32.totalorder %s95, %s97
      %p101 = scmp.eq.s32.totalorder %s14, 0
      %p102 = por %p100, %p101
      %p103 = scmp.ne.s32.totalorder %s95, %s97
      %p104 = scmp.eq.s32.totalorder %s19, 1
      %p105 = por %p103, %p104
      %p106 = scmp.ne.s32.totalorder %s97, %s98
      %p107 = scmp.eq.s32.totalorder %s19, 0
      %p108 = por %p106, %p107
      %p109 = scmp.ne.s32.totalorder %s97, %s98
      %p110 = scmp.eq.s32.totalorder %s20, 1
      %p111 = por %p109, %p110
      %p113 = scmp.ne.s32.totalorder %s98, %s112
      %p114 = scmp.eq.s32.totalorder %s20, 0
      %p115 = por %p113, %p114
      %s117 = sadd.s32 %s116, 1
      %p120 = scmp.eq.s32.totalorder %s14, 1
      %p121 = scmp.ne.s32.totalorder %s116, %s118
      %p122 = scmp.eq.s32.totalorder %s14, 0
      %p123 = por %p121, %p122
      %p124 = scmp.ne.s32.totalorder %s116, %s118
      %p125 = scmp.eq.s32.totalorder %s19, 1
      %p126 = por %p124, %p125
      %p127 = scmp.ne.s32.totalorder %s118, %s119
      %p128 = scmp.eq.s32.totalorder %s19, 0
      %p129 = por %p127, %p128
      %p130 = scmp.ne.s32.totalorder %s118, %s119
      %p131 = scmp.eq.s32.totalorder %s20, 1
      %p132 = por %p130, %p131
      %p134 = scmp.ne.s32.totalorder %s119, %s133
      %p135 = scmp.eq.s32.totalorder %s20, 0
      %p136 = por %p134, %p135
      %s137 = ssub.s32 %s14, %s21
      %p138 = scmp.eq.s32.totalorder %s137, 0
      %s140 = sadd.s32 %s139, 1
      %s141 = scalar_select %p138, %s139, %s140
      %p144 = pneg %p138
      %p145 = scmp.eq.s32.totalorder %s14, 1
      %p146 = por %p144, %p145
      %p147 = scmp.ne.s32.totalorder %s139, %s142
      %p148 = scmp.eq.s32.totalorder %s14, 0
      %p149 = por %p147, %p148
      %p150 = scmp.ne.s32.totalorder %s139, %s142
      %p151 = scmp.eq.s32.totalorder %s19, 1
      %p152 = por %p150, %p151
      %p153 = scmp.ne.s32.totalorder %s142, %s143
      %p154 = scmp.eq.s32.totalorder %s19, 0
      %p155 = por %p153, %p154
      %p156 = scmp.ne.s32.totalorder %s142, %s143
      %p157 = scmp.eq.s32.totalorder %s20, 1
      %p158 = por %p156, %p157
      %p160 = scmp.ne.s32.totalorder %s143, %s159
      %p161 = scmp.eq.s32.totalorder %s20, 0
      %p162 = por %p160, %p161
      %p163 = scmp.le.s32.totalorder 1, %s14
      %p164 = scmp.lt.s32.totalorder %s14, 3
      %p165 = pnand %p163, %p164
      %p166 = pneg %p165
      // Predicated region
      $region9: #{gan_forward.5} parent=5 // pred_check
        _
      $region10: #{gan_forward.5} parent=5 // pred_check_branch
        %168 = sbr.rel (%p165) target = $region12
      $region11: #{gan_forward.5} parent=5 // pred_region
        %s169 = ssub.s32 %s14, 1
        // Predicated region
        $region13: #{gan_forward.5} parent=11 // pred_check
          %p170 = pneg %p87
        $region14: #{gan_forward.5} parent=11 // pred_check_branch
          %172 = sbr.rel (%p170) target = $region16
        $region15: #{gan_forward.5} parent=11 // pred_region
          _
        $region16: #{gan_forward.5} parent=11 // pred_fallthru
          _
        // Predicated region
        $region17: #{gan_forward.5} parent=11 // pred_check
          %p173 = pneg %p108
        $region18: #{gan_forward.5} parent=11 // pred_check_branch
          %175 = sbr.rel (%p173) target = $region20
        $region19: #{gan_forward.5} parent=11 // pred_region
          _
        $region20: #{gan_forward.5} parent=11 // pred_fallthru
          _
        // Predicated region
        $region21: #{gan_forward.5} parent=11 // pred_check
          %p176 = pneg %p129
        $region22: #{gan_forward.5} parent=11 // pred_check_branch
          %178 = sbr.rel (%p176) target = $region24
        $region23: #{gan_forward.5} parent=11 // pred_region
          _
        $region24: #{gan_forward.5} parent=11 // pred_fallthru
          _
      $region12: #{gan_forward.5} parent=5 // pred_fallthru
        _
      %p179 = scmp.lt.s32.totalorder %s14, 2
      // Predicated region
      $region25: #{gan_forward.5} parent=5 // pred_check
        %p180 = pneg %p179
      $region26: #{gan_forward.5} parent=5 // pred_check_branch
        %182 = sbr.rel (%p180) target = $region28
      $region27: #{gan_forward.5} parent=5 // pred_region
        // Predicated region
        $region29: #{gan_forward.5} parent=27 // pred_check
          %p183 = pneg %p34
        $region30: #{gan_forward.5} parent=27 // pred_check_branch
          %185 = sbr.rel (%p183) target = $region32
        $region31: #{gan_forward.5} parent=27 // pred_region
          %p186 = scmp.lt.s32.totalorder %s14, 1
          %s187 = scalar_select %p186, %s14, 1
          %s188 = smul.addr %s187, 12
          %s189 = smul.addr %s188, 8
          %s190 = scalar_lea.vmem %s0, %s189
        $region32: #{gan_forward.5} parent=27 // pred_fallthru
          _
        // Predicated region
        $region33: #{gan_forward.5} parent=27 // pred_check
          %p191 = pneg %p60
        $region34: #{gan_forward.5} parent=27 // pred_check_branch
          %193 = sbr.rel (%p191) target = $region36
        $region35: #{gan_forward.5} parent=27 // pred_region
          %p194 = scmp.lt.s32.totalorder %s14, 1
          %s195 = scalar_select %p194, %s14, 1
          %s196 = smul.addr %s195, 12
          %s197 = smul.addr %s196, 8
          %s198 = scalar_lea.vmem %s1, %s197
        $region36: #{gan_forward.5} parent=27 // pred_fallthru
          _
      $region28: #{gan_forward.5} parent=5 // pred_fallthru
        _
      %p199 = scmp.le.s32.totalorder 1, %s14
      %p200 = scmp.lt.s32.totalorder %s14, 3
      %p201 = pnand %p199, %p200
      %p202 = pneg %p201
      // Predicated region
      $region37: #{gan_forward.5} parent=5 // pred_check
        _
      $region38: #{gan_forward.5} parent=5 // pred_check_branch
        %204 = sbr.rel (%p201) target = $region40
      $region39: #{gan_forward.5} parent=5 // pred_region
        %s205 = ssub.s32 %s14, 1
        %p206 = scmp.lt.s32.totalorder %s19, 1
        %s207 = scalar_select %p206, %s19, 1
        %s208 = smul.addr %s207, 12
        %s209 = smul.addr %s208, 8
        %s210 = scalar_lea.vmem %s0, %s209
        %p211 = pneg %p40
        %p212 = pneg %p37
        %p213 = scmp.lt.s32.totalorder %s19, 1
        %s214 = scalar_select %p213, %s19, 1
        %s215 = smul.addr %s214, 12
        %s216 = smul.addr %s215, 8
        %s217 = scalar_lea.vmem %s1, %s216
        %p218 = pneg %p66
        %p219 = pneg %p63
        %p220 = pneg %p87
        %p221 = pneg %p84
        %p222 = pneg %p108
        %p223 = pneg %p105
        %p224 = pneg %p129
        %p225 = pneg %p126
        %p226 = pneg %p155
        %p227 = pneg %p152
        %s228 = sand.u32 %s142, 1
        %s229 = scalar_lea.sflag [#allocation3], %s228
        %s230 = sand.u32 %s142, 1
        %s231 = smul.addr %s230, 8
        %s232 = scalar_lea.vmem [#allocation2], %s231
        %p233 = scmp.lt.s32.totalorder %s19, 1
        %s234 = scalar_select %p233, %s19, 1
        %s235 = smul.addr %s234, 12
        %s236 = smul.addr %s235, 8
        %s237 = scalar_lea.vmem %s0, %s236
        %p238 = scmp.lt.s32.totalorder %s19, 1
        %s239 = scalar_select %p238, %s19, 1
        %s240 = smul.addr %s239, 12
        %s241 = smul.addr %s240, 8
        %s242 = scalar_lea.vmem %s1, %s241
        %v243 = vld [vmem:[%s237] sm:$0xff]
        %v244 = vld [vmem:[%s237 + $0x8] sm:$0xff]
        %v245 = vld [vmem:[%s237 + $0x10] sm:$0xff]
        %v246 = vld [vmem:[%s237 + $0x18] sm:$0xff]
        %v247 = vld [vmem:[%s237 + $0x20] sm:$0xff]
        %v248 = vld [vmem:[%s237 + $0x28] sm:$0xff]
        %v249 = vld [vmem:[%s237 + $0x30] sm:$0xff]
        %v250 = vld [vmem:[%s237 + $0x38] sm:$0xff]
        %v251 = vld [vmem:[%s237 + $0x40] sm:$0xff]
        %v252 = vld [vmem:[%s237 + $0x48] sm:$0xff]
        %v253 = vld [vmem:[%s237 + $0x50] sm:$0xff]
        %v254 = vld [vmem:[%s237 + $0x58] sm:$0xff]
        %v255 = vld [vmem:[%s242] sm:$0xff]
        %v256 = vld [vmem:[%s242 + $0x8] sm:$0xff]
        %v257 = vld [vmem:[%s242 + $0x10] sm:$0xff]
        %v258 = vld [vmem:[%s242 + $0x18] sm:$0xff]
        %v259 = vld [vmem:[%s242 + $0x20] sm:$0xff]
        %v260 = vld [vmem:[%s242 + $0x28] sm:$0xff]
        %v261 = vld [vmem:[%s242 + $0x30] sm:$0xff]
        %v262 = vld [vmem:[%s242 + $0x38] sm:$0xff]
        %v263 = vld [vmem:[%s242 + $0x40] sm:$0xff]
        %v264 = vld [vmem:[%s242 + $0x48] sm:$0xff]
        %v265 = vld [vmem:[%s242 + $0x50] sm:$0xff]
        %v266 = vld [vmem:[%s242 + $0x58] sm:$0xff]
        %v267 = vsub.f32 %v243, %v255
        %v268 = vsub.f32 %v244, %v256
        %v269 = vsub.f32 %v245, %v257
        %v270 = vsub.f32 %v246, %v258
        %v271 = vsub.f32 %v247, %v259
        %v272 = vsub.f32 %v248, %v260
        %v273 = vsub.f32 %v249, %v261
        %v274 = vsub.f32 %v250, %v262
        %v275 = vsub.f32 %v251, %v263
        %v276 = vsub.f32 %v252, %v264
        %v277 = vsub.f32 %v253, %v265
        %v278 = vsub.f32 %v254, %v266
        %v279 = vand.u32 2147483647, %v267
        %v280 = vand.u32 2147483647, %v268
        %v281 = vand.u32 2147483647, %v269
        %v282 = vand.u32 2147483647, %v270
        %v283 = vand.u32 2147483647, %v271
        %v284 = vand.u32 2147483647, %v272
        %v285 = vand.u32 2147483647, %v273
        %v286 = vand.u32 2147483647, %v274
        %v287 = vand.u32 2147483647, %v275
        %v288 = vand.u32 2147483647, %v276
        %v289 = vand.u32 2147483647, %v277
        %v290 = vand.u32 2147483647, %v278
        %vm291 = vcmask 261120
        %v292 = vsel %vm291, %v279, 0.0
        %v293 = vsel %vm291, %v283, 0.0
        %v294 = vadd.f32 %v292, %v293
        %v295 = vsel %vm291, %v287, 0.0
        %v296 = vadd.f32 %v294, %v295
        %v297 = vsel %vm291, %v280, 0.0
        %v298 = vsel %vm291, %v284, 0.0
        %v299 = vadd.f32 %v297, %v298
        %v300 = vsel %vm291, %v288, 0.0
        %v301 = vadd.f32 %v299, %v300
        %v302 = vsel %vm291, %v281, 0.0
        %v303 = vsel %vm291, %v285, 0.0
        %v304 = vadd.f32 %v302, %v303
        %v305 = vsel %vm291, %v289, 0.0
        %v306 = vadd.f32 %v304, %v305
        %v307 = vsel %vm291, %v282, 0.0
        %v308 = vsel %vm291, %v286, 0.0
        %v309 = vadd.f32 %v307, %v308
        %v310 = vsel %vm291, %v290, 0.0
        %v311 = vadd.f32 %v309, %v310
        %v312 = vrcp.pop 3.0
        %v313 = vmul.f32 %v296, %v312
        %v314 = vmul.f32 %v301, %v312
        %v315 = vmul.f32 %v306, %v312
        %v316 = vmul.f32 %v311, %v312
        %v317 = vld [vmem:[%s3] sm:$0xff]
        %v318 = vld [vmem:[%s3 + $0x8] sm:$0xff]
        %v319 = vld [vmem:[%s3 + $0x10] sm:$0xff]
        %v320 = vld [vmem:[%s3 + $0x18] sm:$0xff]
        %v322 = vsel %vm291, %v313, 0
        %v325 = vsel %vm291, %v314, 0
        %v328 = vsel %vm291, %v315, 0
        %v331 = vsel %vm291, %v316, 0
        %333 = vmatprep.subr.mxu0 0.0
        %334 = vmatpush1.msra.mxu0 0.0
        %335 = vmatprep.subr.mxu0 0.0
        %336 = vmatpush1.msra.mxu0 0.0
        %337 = vmatprep.subr.mxu0 0.0
        %338 = vmatpush1.msra.mxu0 0.0
        %339 = vmatprep.subr.mxu0 0.0
        %340 = vmatpush1.msra.mxu0 0.0
        %341 = vmatprep.subr.mxu0 0.0
        %342 = vmatpush1.msra.mxu0 0.0
        %343 = vmatprep.subr.mxu0 0.0
        %344 = vmatpush1.msra.mxu0 0.0
        %345 = vmatprep.subr.mxu0 0.0
        %346 = vmatpush1.msra.mxu0 0.0
        %347 = vmatprep.subr.mxu0 0.0
        %348 = vmatpush1.msra.mxu0 0.0
        %349 = vmatprep.subr.mxu0 0.0
        %350 = vmatpush1.msra.mxu0 0.0
        %351 = vmatprep.subr.mxu0 0.0
        %352 = vmatpush1.msra.mxu0 0.0
        %353 = vmatprep.subr.mxu0 0.0
        %354 = vmatpush1.msra.mxu0 0.0
        %355 = vmatprep.subr.mxu0 0.0
        %356 = vmatpush1.msra.mxu0 0.0
        %357 = vmatprep.subr.mxu0 0.0
        %358 = vmatpush1.msra.mxu0 %v320
        %359 = vmatprep.subr.mxu0 0.0
        %360 = vmatpush1.msra.mxu0 %v319
        %361 = vmatprep.subr.mxu0 0.0
        %362 = vmatpush1.msra.mxu0 %v318
        %363 = vmatprep.subr.mxu0 0.0
        %364 = vmatpush1.msra.mxu0 %v317
        %365 = vmatprep.subr.mxu0 0.0
        %366 = vmatpush2.msra.mxu0 0.0
        %367 = vmatprep.subr.mxu0 0.0
        %368 = vmatpush2.msra.mxu0 0.0
        %369 = vmatprep.subr.mxu0 0.0
        %370 = vmatpush2.msra.mxu0 0.0
        %371 = vmatprep.subr.mxu0 0.0
        %372 = vmatpush2.msra.mxu0 0.0
        %373 = vmatprep.subr.mxu0 0.0
        %374 = vmatpush2.msra.mxu0 0.0
        %375 = vmatprep.subr.mxu0 0.0
        %376 = vmatpush2.msra.mxu0 0.0
        %377 = vmatprep.subr.mxu0 0.0
        %378 = vmatpush2.msra.mxu0 0.0
        %379 = vmatprep.subr.mxu0 0.0
        %380 = vmatpush2.msra.mxu0 0.0
        %381 = vmatprep.subr.mxu0 0.0
        %382 = vmatpush2.msra.mxu0 0.0
        %383 = vmatprep.subr.mxu0 0.0
        %384 = vmatpush2.msra.mxu0 0.0
        %385 = vmatprep.subr.mxu0 0.0
        %386 = vmatpush2.msra.mxu0 0.0
        %387 = vmatprep.subr.mxu0 0.0
        %388 = vmatpush2.msra.mxu0 0.0
        %389 = vmatprep.subr.mxu0 0.0
        %390 = vmatpush2.msra.mxu0 0.0
        %391 = vmatprep.subr.mxu0 0.0
        %392 = vmatpush2.msra.mxu0 0.0
        %393 = vmatprep.subr.mxu0 0.0
        %394 = vmatpush2.msra.mxu0 0.0
        %395 = vmatprep.subr.mxu0 0.0
        %396 = vmatpush2.msra.mxu0 0.0
        %397 = vmatprep.mubr.f32.mxu0 0.0
        %398 = vmatmul.mubr.f32.gmra.mxu0 %v322
        %v399 = vpop.f32.mrf.mxu0
        %v400 = vadd.f32 0.0, %v399
        %v401 = vpop.f32.mrf.mxu0
        %402 = vmatprep.mubr.f32.mxu0 0.0
        %403 = vmatmul.mubr.f32.gmra.mxu0 %v325
        %v404 = vpop.f32.mrf.mxu0
        %v405 = vadd.f32 0.0, %v404
        %v406 = vpop.f32.mrf.mxu0
        %407 = vmatprep.mubr.f32.mxu0 0.0
        %408 = vmatmul.mubr.f32.gmra.mxu0 %v328
        %v409 = vpop.f32.mrf.mxu0
        %v410 = vadd.f32 0.0, %v409
        %v411 = vpop.f32.mrf.mxu0
        %412 = vmatprep.mubr.f32.mxu0 0.0
        %413 = vmatmul.mubr.f32.gmra.mxu0 %v331
        %v414 = vpop.f32.mrf.mxu0
        %v415 = vadd.f32 0.0, %v414
        %v416 = vpop.f32.mrf.mxu0
        %417 = vdwg.mxu0
        %v418 = vld [vmem:[%s2] sm:$0xff]
        %v420 = vsel %vm291, %v418, 0
        %422 = vmatprep.subr.mxu0 0.0
        %423 = vmatpush1.msra.mxu0 0.0
        %424 = vmatprep.subr.mxu0 0.0
        %425 = vmatpush1.msra.mxu0 0.0
        %426 = vmatprep.subr.mxu0 0.0
        %427 = vmatpush1.msra.mxu0 0.0
        %428 = vmatprep.subr.mxu0 0.0
        %429 = vmatpush1.msra.mxu0 0.0
        %430 = vmatprep.subr.mxu0 0.0
        %431 = vmatpush1.msra.mxu0 0.0
        %432 = vmatprep.subr.mxu0 0.0
        %433 = vmatpush1.msra.mxu0 0.0
        %434 = vmatprep.subr.mxu0 0.0
        %435 = vmatpush1.msra.mxu0 0.0
        %436 = vmatprep.subr.mxu0 0.0
        %437 = vmatpush1.msra.mxu0 0.0
        %438 = vmatprep.subr.mxu0 0.0
        %439 = vmatpush1.msra.mxu0 0.0
        %440 = vmatprep.subr.mxu0 0.0
        %441 = vmatpush1.msra.mxu0 0.0
        %442 = vmatprep.subr.mxu0 0.0
        %443 = vmatpush1.msra.mxu0 0.0
        %444 = vmatprep.subr.mxu0 0.0
        %445 = vmatpush1.msra.mxu0 0.0
        %446 = vmatprep.subr.mxu0 0.0
        %447 = vmatpush1.msra.mxu0 %v415
        %448 = vmatprep.subr.mxu0 0.0
        %449 = vmatpush1.msra.mxu0 %v410
        %450 = vmatprep.subr.mxu0 0.0
        %451 = vmatpush1.msra.mxu0 %v405
        %452 = vmatprep.subr.mxu0 0.0
        %453 = vmatpush1.msra.mxu0 %v400
        %454 = vmatprep.subr.mxu0 0.0
        %455 = vmatpush2.msra.mxu0 0.0
        %456 = vmatprep.subr.mxu0 0.0
        %457 = vmatpush2.msra.mxu0 0.0
        %458 = vmatprep.subr.mxu0 0.0
        %459 = vmatpush2.msra.mxu0 0.0
        %460 = vmatprep.subr.mxu0 0.0
        %461 = vmatpush2.msra.mxu0 0.0
        %462 = vmatprep.subr.mxu0 0.0
        %463 = vmatpush2.msra.mxu0 0.0
        %464 = vmatprep.subr.mxu0 0.0
        %465 = vmatpush2.msra.mxu0 0.0
        %466 = vmatprep.subr.mxu0 0.0
        %467 = vmatpush2.msra.mxu0 0.0
        %468 = vmatprep.subr.mxu0 0.0
        %469 = vmatpush2.msra.mxu0 0.0
        %470 = vmatprep.subr.mxu0 0.0
        %471 = vmatpush2.msra.mxu0 0.0
        %472 = vmatprep.subr.mxu0 0.0
        %473 = vmatpush2.msra.mxu0 0.0
        %474 = vmatprep.subr.mxu0 0.0
        %475 = vmatpush2.msra.mxu0 0.0
        %476 = vmatprep.subr.mxu0 0.0
        %477 = vmatpush2.msra.mxu0 0.0
        %478 = vmatprep.subr.mxu0 0.0
        %479 = vmatpush2.msra.mxu0 0.0
        %480 = vmatprep.subr.mxu0 0.0
        %481 = vmatpush2.msra.mxu0 0.0
        %482 = vmatprep.subr.mxu0 0.0
        %483 = vmatpush2.msra.mxu0 0.0
        %484 = vmatprep.subr.mxu0 0.0
        %485 = vmatpush2.msra.mxu0 0.0
        %486 = vmatprep.mubr.f32.mxu0 0.0
        %487 = vmatmul.mubr.f32.gmra.mxu0 %v420
        %v488 = vpop.f32.mrf.mxu0
        %v489 = vadd.f32 0.0, %v488
        %v490 = vpop.f32.mrf.mxu0
        %491 = vdwg.mxu0
        %v492 = vld [vmem:[%s4] sm:$0xff]
        %vm493 = vcmp.le.f32.partialorder %v489, %v492
        %v494 = vsel %vm493, 1, 0
        %v495 = vcvt.s32.f32 %v494
        %vm496 = vcmask 64512
        %497 = vst.msk [vmem:[%s232] sm:$0xff] %vm496, %v495
        %s498 = sand.u32 %s142, 1
        %s499 = scalar_lea.sflag [#allocation3], %s498
        %s500 = sand.u32 %s142, 1
        %s501 = smul.addr %s500, 8
        %s502 = scalar_lea.vmem [#allocation2], %s501
        // Predicated region
        $region41: #{gan_forward.5} parent=39 // pred_check
          %p503 = pneg %p152
        $region42: #{gan_forward.5} parent=39 // pred_check_branch
          %505 = sbr.rel (%p503) target = $region44
        $region43: #{gan_forward.5} parent=39 // pred_region
          %s507 = ssub.s32 128, 128
          %508 = vsyncadd %s499, %s507
          %s509 = smul.addr %s19, 128
          %s510 = scalar_lea.hbm %s5, %s509
          %s512 = sshll.u32 %s502, 4
          %s513 = int_to_ptr.vmem [resolvable:$true] %s512
          %515 = dma.vmem_to_hbm [thread:$0]  %s513, 128, %s510, %s499
        $region44: #{gan_forward.5} parent=39 // pred_fallthru
          _
      $region40: #{gan_forward.5} parent=5 // pred_fallthru
        _
      %p516 = scmp.le.s32.totalorder 2, %s14
      // Predicated region
      $region45: #{gan_forward.5} parent=5 // pred_check
        %p517 = pneg %p516
      $region46: #{gan_forward.5} parent=5 // pred_check_branch
        %519 = sbr.rel (%p517) target = $region48
      $region47: #{gan_forward.5} parent=5 // pred_region
        %s520 = ssub.s32 %s14, 2
        // Predicated region
        $region49: #{gan_forward.5} parent=47 // pred_check
          %p521 = pneg %p158
        $region50: #{gan_forward.5} parent=47 // pred_check_branch
          %523 = sbr.rel (%p521) target = $region52
        $region51: #{gan_forward.5} parent=47 // pred_region
          %s524 = sand.u32 %s143, 1
          %s525 = scalar_lea.sflag [#allocation3], %s524
          %s526 = sand.u32 %s143, 1
          %s527 = smul.addr %s526, 8
          %s528 = scalar_lea.vmem [#allocation2], %s527
          %529 = dma.done %s525, 128
        $region52: #{gan_forward.5} parent=47 // pred_fallthru
          _
      $region48: #{gan_forward.5} parent=5 // pred_fallthru
        _
    $region6: #{gan_forward.5} parent=1 // loop_footer
      %s18 = sadd.s32 1, %s14
    $region7: #{gan_forward.5} parent=1 // loop_footer_branch
      %13 = sbr.rel target = $region3
    $region8: #{gan_forward.5} parent=1 // loop_exit
      _
    %530 = vsyncpa [#allocation3], 1
    %s531 = scalar_lea.sflag [#allocation3], 1
    %532 = vsyncpa %s531, 1

</llo_original>
